<compile_context>
chip_gen: v7x
topology: tpu7x:2x2x1
jax: 0.10.0
libtpu: 0.0.40
codegen_flags: <defaults>
</compile_context>

<pallas_src>
import functools

import jax
import jax.numpy as jnp
from jax.experimental import pallas as pl
from jax.experimental.pallas import tpu as pltpu

LANE = 128        # TPU lane width: all feature dims padded to this
G_PAD = 8         # graph (batch) dimension padded to a full sublane group
NUM_LAYERS = 3    # conv1, conv2, conv3


def _round_up(x, m):
    return ((x + m - 1) // m) * m


# ----------------------------- fused Pallas kernel ----------------------------- #

def _fused_gcn_kernel(a_ref, x_ref, w_ref, b_ref, p_ref, wl_ref, bl_ref,
                      o_ref, h_ref, xw_ref, acc_ref, *, tile_m, tile_k):
    layer = pl.program_id(0)
    i = pl.program_id(1)
    k = pl.program_id(2)
    num_i = pl.num_programs(1)
    num_k = pl.num_programs(2)

    # Very first grid step: H <- padded node features.
    @pl.when((layer == 0) & (i == 0) & (k == 0))
    def _():
        h_ref[...] = x_ref[...]

    # Start of every layer: snapshot XW = H @ W_layer once (N_pad x 128, tiny),
    # cast to bf16 -- it is the stationary operand of the streamed A_hat matmul.
    @pl.when((i == 0) & (k == 0))
    def _():
        xw = jnp.dot(h_ref[...], w_ref[...], preferred_element_type=jnp.float32)
        xw_ref[...] = xw.astype(xw_ref.dtype)

    # Row-tile accumulator init at the start of the reduction.
    @pl.when(k == 0)
    def _():
        acc_ref[...] = jnp.zeros_like(acc_ref)

    # acc += A_hat[i, k] @ XW[k]      (bf16 x bf16 -> f32 on the MXU)
    k_start = pl.multiple_of(k * tile_k, tile_k)
    acc_ref[...] += jnp.dot(a_ref[...], xw_ref[pl.ds(k_start, tile_k), :],
                            preferred_element_type=jnp.float32)

    # Finalize the row tile: + bias, ReLU on layers 0/1, write rows back into H.
    @pl.when(k == num_k - 1)
    def _():
        row = acc_ref[...] + b_ref[...]
        row = jnp.where(layer < NUM_LAYERS - 1, jnp.maximum(row, 0.0), row)
        i_start = pl.multiple_of(i * tile_m, tile_m)
        h_ref[pl.ds(i_start, tile_m), :] = row

    # Last grid step: global_mean_pool (P @ H) + Linear, single lane-dense store.
    # TODO(synk): F.dropout(p=0.5) is identity in eval mode; a training path would
    # draw a mask with pltpu.prng_seed / pltpu.prng_random_bits here.
    @pl.when((layer == NUM_LAYERS - 1) & (i == num_i - 1) & (k == num_k - 1))
    def _():
        pooled = jnp.dot(p_ref[...], h_ref[...], preferred_element_type=jnp.float32)
        o_ref[...] = (
            jnp.dot(pooled, wl_ref[...], preferred_element_type=jnp.float32)
            + bl_ref[...]
        )


def gcn_forward_fused(padded, *, tile_m=256, tile_k=256):
    a_hat = padded["a_hat"]          # (n_pad, n_pad) bf16
    x = padded["x"]                  # (n_pad, LANE)  f32
    w_stack = padded["w_stack"]      # (3, LANE, LANE) f32
    b_stack = padded["b_stack"]      # (3, 1, LANE)    f32
    pool = padded["pool"]            # (G_PAD, n_pad)  f32
    w_lin_t = padded["w_lin_t"]      # (LANE, LANE)    f32
    b_lin = padded["b_lin"]          # (1, LANE)       f32

    n_pad = a_hat.shape[0]
    grid = (NUM_LAYERS, n_pad // tile_m, n_pad // tile_k)

    kern = functools.partial(_fused_gcn_kernel, tile_m=tile_m, tile_k=tile_k)

    return pl.pallas_call(
        kern,
        out_shape=jax.ShapeDtypeStruct((G_PAD, LANE), jnp.float32),
        grid_spec=pltpu.PrefetchScalarGridSpec(
            num_scalar_prefetch=0,
            grid=grid,
            in_specs=[
                # Streamed A_hat tiles: (row tile, reduction tile).
                pl.BlockSpec((tile_m, tile_k), lambda l, i, k: (i, k)),
                # VMEM-resident operands (block index constant across the grid).
                pl.BlockSpec((n_pad, LANE), lambda l, i, k: (0, 0)),
                # Per-layer weight / bias planes (leading layer dim squeezed away).
                pl.BlockSpec((None, LANE, LANE), lambda l, i, k: (l, 0, 0)),
                pl.BlockSpec((None, 1, LANE), lambda l, i, k: (l, 0, 0)),
                pl.BlockSpec((G_PAD, n_pad), lambda l, i, k: (0, 0)),
                pl.BlockSpec((LANE, LANE), lambda l, i, k: (0, 0)),
                pl.BlockSpec((1, LANE), lambda l, i, k: (0, 0)),
            ],
            out_specs=pl.BlockSpec((G_PAD, LANE), lambda l, i, k: (0, 0)),
            scratch_shapes=[
                pltpu.VMEM((n_pad, LANE), jnp.float32),    # H (layer activations)
                pltpu.VMEM((n_pad, LANE), jnp.bfloat16),   # XW snapshot
                pltpu.VMEM((tile_m, LANE), jnp.float32),   # row-tile f32 accumulator
            ],
        ),
        compiler_params=pltpu.CompilerParams(
            # Every axis carries VMEM-resident state (H / accumulator) across
            # iterations, so all axes are sequential ("arbitrary").
            dimension_semantics=("arbitrary", "arbitrary", "arbitrary"),
            vmem_limit_bytes=48 * 1024 * 1024,
        ),
    )(a_hat, x, w_stack, b_stack, pool, w_lin_t, b_lin)


# ------------------------------- plain-JAX glue ------------------------------- #

def build_norm_adj(edge_index, num_nodes):
    """Dense GCN-normalized adjacency: D^{-1/2} (A + I) D^{-1/2}."""
    src = edge_index[0]
    dst = edge_index[1]
    a = jnp.zeros((num_nodes, num_nodes), jnp.float32).at[dst, src].add(1.0)
    a = a + jnp.eye(num_nodes, dtype=jnp.float32)
    deg = a.sum(axis=1)
    dinv = jnp.where(deg > 0, 1.0 / jnp.sqrt(deg), 0.0)
    return dinv[:, None] * a * dinv[None, :]


def build_pool_matrix(batch, num_graphs):
    """(G, N) matrix whose rows average node features of each graph."""
    one_hot = (batch[None, :] == jnp.arange(num_graphs)[:, None]).astype(jnp.float32)
    counts = jnp.maximum(one_hot.sum(axis=1, keepdims=True), 1.0)
    return one_hot / counts


def _pad2(a, rows, cols):
    return jnp.pad(a, ((0, rows - a.shape[0]), (0, cols - a.shape[1])))


def prepare_inputs(params, x, a_hat, pool_mat, *, tile):
    """Zero-pad everything to lane-dense / tile-aligned shapes (padding is exact 0)."""
    n = x.shape[0]
    n_pad = _round_up(max(n, tile), tile)

    w1 = _pad2(params["w1"], LANE, LANE)
    w2 = _pad2(params["w2"], LANE, LANE)
    w3 = _pad2(params["w3"], LANE, LANE)
    b1 = _pad2(params["b1"].reshape(1, -1), 1, LANE)
    b2 = _pad2(params["b2"].reshape(1, -1), 1, LANE)
    b3 = _pad2(params["b3"].reshape(1, -1), 1, LANE)

    return {
        "a_hat": _pad2(a_hat, n_pad, n_pad).astype(jnp.bfloat16),
        "x": _pad2(x.astype(jnp.float32), n_pad, LANE),
        "w_stack": jnp.stack([w1, w2, w3]),
        "b_stack": jnp.stack([b1, b2, b3]),
        "pool": _pad2(pool_mat, G_PAD, n_pad),
        # Linear weight pre-transposed once: (in_features, out_classes), zero-padded.
        "w_lin_t": _pad2(params["w_lin"].T, LANE, LANE),
        "b_lin": _pad2(params["b_lin"].reshape(1, -1), 1, LANE),
    }


def gcn_forward(params, x, a_hat, pool_mat, *, tile_m=256, tile_k=256):
    num_graphs = pool_mat.shape[0]
    num_classes = params["w_lin"].shape[0]
    padded = prepare_inputs(params, x, a_hat, pool_mat, tile=max(tile_m, tile_k))
    out_pad = gcn_forward_fused(padded, tile_m=tile_m, tile_k=tile_k)
    return out_pad[:num_graphs, :num_classes]


def gcn_reference(params, x, a_hat, pool_mat):
    x = x.astype(jnp.float32)
    h = jnp.maximum(a_hat @ (x @ params["w1"]) + params["b1"], 0.0)
    h = jnp.maximum(a_hat @ (h @ params["w2"]) + params["b2"], 0.0)
    h = a_hat @ (h @ params["w3"]) + params["b3"]
    pooled = pool_mat @ h
    return pooled @ params["w_lin"].T + params["b_lin"]


# ----------------------------------- main ----------------------------------- #

if __name__ == "__main__":
    N = 16          # total nodes across the batched graphs
    F_IN = 4        # dataset.num_node_features
    HIDDEN = 32     # hidden_channels
    CLASSES = 4     # dataset.num_classes
    GRAPHS = 2      # number of graphs in the batch

    key = jax.random.PRNGKey(0)
    ks = jax.random.split(key, 9)

    # Deterministic parameters (synthetic init, not a checkpoint load).
    params = {
        "w1": jax.random.normal(ks[0], (F_IN, HIDDEN), jnp.float32) * 0.1,
        "b1": jax.random.normal(ks[1], (HIDDEN,), jnp.float32) * 0.1,
        "w2": jax.random.normal(ks[2], (HIDDEN, HIDDEN), jnp.float32) * 0.1,
        "b2": jax.random.normal(ks[3], (HIDDEN,), jnp.float32) * 0.1,
        "w3": jax.random.normal(ks[4], (HIDDEN, HIDDEN), jnp.float32) * 0.1,
        "b3": jax.random.normal(ks[5], (HIDDEN,), jnp.float32) * 0.1,
        "w_lin": jax.random.normal(ks[6], (CLASSES, HIDDEN), jnp.float32) * 0.1,
        "b_lin": jax.random.normal(ks[7], (CLASSES,), jnp.float32) * 0.1,
    }

    # Node features.
    x = jax.random.normal(ks[8], (N, F_IN), jnp.float32)

    # Two ring graphs of 8 nodes each (directed edges both ways), no cross edges.
    src_list, dst_list = [], []
    for base in (0, 8):
        for i in range(8):
            a, b = base + i, base + (i + 1) % 8
            src_list += [a, b]
            dst_list += [b, a]
    edge_index = jnp.array([src_list, dst_list], dtype=jnp.int32)

    # Graph assignment vector (first 8 nodes -> graph 0, last 8 -> graph 1).
    batch = jnp.array([0] * 8 + [1] * 8, dtype=jnp.int32)

    a_hat = build_norm_adj(edge_index, N)
    pool_mat = build_pool_matrix(batch, GRAPHS)

    out = gcn_forward(params, x, a_hat, pool_mat)
    out = jax.block_until_ready(out)

    ref = gcn_reference(params, x, a_hat, pool_mat)
    assert out.shape == (GRAPHS, CLASSES)
    # bf16 A_hat / XW streaming (f32 accumulation) -> loosened tolerance vs f32 ref.
    assert jnp.allclose(out, ref, atol=2e-2, rtol=2e-2), "Pallas output mismatch"

    print("KERNEL_OK")
</pallas_src>

<mosaic_0001>
module attributes {stable_mosaic.version = 11 : i64} {
  func.func @_fused_gcn_kernel(%arg0: i32, %arg1: i32, %arg2: i32, %arg3: memref<256x256xbf16, #tpu.memory_space<vmem>>, %arg4: memref<256x128xf32, #tpu.memory_space<vmem>>, %arg5: memref<1x128x128xf32, #tpu.memory_space<vmem>>, %arg6: memref<1x1x128xf32, #tpu.memory_space<vmem>>, %arg7: memref<8x256xf32, #tpu.memory_space<vmem>>, %arg8: memref<128x128xf32, #tpu.memory_space<vmem>>, %arg9: memref<1x128xf32, #tpu.memory_space<vmem>>, %arg10: memref<8x128xf32, #tpu.memory_space<vmem>>, %arg11: memref<256x128xf32, #tpu.memory_space<vmem>>, %arg12: memref<256x128xbf16, #tpu.memory_space<vmem>>, %arg13: memref<256x128xf32, #tpu.memory_space<vmem>>) attributes {dimension_semantics = [#tpu.dimension_semantics<arbitrary>, #tpu.dimension_semantics<arbitrary>, #tpu.dimension_semantics<arbitrary>], iteration_bounds = array<i64: 3, 1, 1>, scalar_prefetch = 0 : i64, scratch_operands = 3 : i64, tpu.core_type = #tpu.core_type<tc>, window_params = [{transform_indices = @transform_0, window_bounds = array<i64: 256, 256>}, {pipeline_mode = #tpu.pipeline_mode<synchronous>, transform_indices = @transform_1, window_bounds = array<i64: 256, 128>}, {transform_indices = @transform_2, window_bounds = array<i64: 1, 128, 128>}, {transform_indices = @transform_3, window_bounds = array<i64: 1, 1, 128>}, {pipeline_mode = #tpu.pipeline_mode<synchronous>, transform_indices = @transform_4, window_bounds = array<i64: 8, 256>}, {pipeline_mode = #tpu.pipeline_mode<synchronous>, transform_indices = @transform_5, window_bounds = array<i64: 128, 128>}, {pipeline_mode = #tpu.pipeline_mode<synchronous>, transform_indices = @transform_6, window_bounds = array<i64: 1, 128>}, {pipeline_mode = #tpu.pipeline_mode<synchronous>, transform_indices = @transform_7, window_bounds = array<i64: 8, 128>}]} {
    %c0_i32 = arith.constant 0 : i32
    %0 = arith.cmpi eq, %arg0, %c0_i32 : i32
    %c0_i32_0 = arith.constant 0 : i32
    %1 = arith.cmpi eq, %arg1, %c0_i32_0 : i32
    %2 = arith.andi %0, %1 : i1
    %c0_i32_1 = arith.constant 0 : i32
    %3 = arith.cmpi eq, %arg2, %c0_i32_1 : i32
    %4 = arith.andi %2, %3 : i1
    %5 = arith.extui %4 : i1 to i32
    %c0_i32_2 = arith.constant 0 : i32
    %6 = arith.cmpi ne, %5, %c0_i32_2 : i32
    scf.if %6 {
      %c0_19 = arith.constant 0 : index
      %c0_20 = arith.constant 0 : index
      %34 = vector.load %arg4[%c0_19, %c0_20] : memref<256x128xf32, #tpu.memory_space<vmem>>, vector<256x128xf32>
      %c0_21 = arith.constant 0 : index
      %c0_22 = arith.constant 0 : index
      %35 = vector.load %arg11[%c0_21, %c0_22] : memref<256x128xf32, #tpu.memory_space<vmem>>, vector<256x128xf32>
      tpu.vector_store %arg11[%c0_21, %c0_22], %34 {strides = array<i32>} : memref<256x128xf32, #tpu.memory_space<vmem>>, vector<256x128xf32>,
    } else {
    }
    %c0_i32_3 = arith.constant 0 : i32
    %7 = arith.cmpi eq, %arg1, %c0_i32_3 : i32
    %c0_i32_4 = arith.constant 0 : i32
    %8 = arith.cmpi eq, %arg2, %c0_i32_4 : i32
    %9 = arith.andi %7, %8 : i1
    %10 = arith.extui %9 : i1 to i32
    %c0_i32_5 = arith.constant 0 : i32
    %11 = arith.cmpi ne, %10, %c0_i32_5 : i32
    scf.if %11 {
      %c0_19 = arith.constant 0 : index
      %c0_20 = arith.constant 0 : index
      %34 = vector.load %arg11[%c0_19, %c0_20] : memref<256x128xf32, #tpu.memory_space<vmem>>, vector<256x128xf32>
      %c0_21 = arith.constant 0 : index
      %c0_22 = arith.constant 0 : index
      %c0_23 = arith.constant 0 : index
      %35 = vector.load %arg5[%c0_21, %c0_22, %c0_23] : memref<1x128x128xf32, #tpu.memory_space<vmem>>, vector<1x128x128xf32>
      %36 = vector.shape_cast %35 : vector<1x128x128xf32> to vector<128x128xf32>
      %cst_24 = arith.constant dense<0.000000e+00> : vector<256x128xf32>
      %37 = tpu.matmul %34, %36, %cst_24 {dimension_numbers = #tpu.dot_dimension_numbers<[1], [0], [0], [1], [0, 0, 1, 1], [], []>} : vector<256x128xf32>, vector<128x128xf32>, vector<256x128xf32> -> vector<256x128xf32>
      %38 = arith.truncf %37 : vector<256x128xf32> to vector<256x128xbf16>
      %c0_25 = arith.constant 0 : index
      %c0_26 = arith.constant 0 : index
      %39 = vector.load %arg12[%c0_25, %c0_26] : memref<256x128xbf16, #tpu.memory_space<vmem>>, vector<256x128xbf16>
      tpu.vector_store %arg12[%c0_25, %c0_26], %38 {strides = array<i32>} : memref<256x128xbf16, #tpu.memory_space<vmem>>, vector<256x128xbf16>,
    } else {
    }
    %c0_i32_6 = arith.constant 0 : i32
    %12 = arith.cmpi eq, %arg2, %c0_i32_6 : i32
    %13 = arith.extui %12 : i1 to i32
    %c0_i32_7 = arith.constant 0 : i32
    %14 = arith.cmpi ne, %13, %c0_i32_7 : i32
    scf.if %14 {
      %cst_19 = arith.constant 0.000000e+00 : f32
      %34 = vector.broadcast %cst_19 : f32 to vector<256x128xf32>
      %c0_20 = arith.constant 0 : index
      %c0_21 = arith.constant 0 : index
      %35 = vector.load %arg13[%c0_20, %c0_21] : memref<256x128xf32, #tpu.memory_space<vmem>>, vector<256x128xf32>
      tpu.vector_store %arg13[%c0_20, %c0_21], %34 {strides = array<i32>} : memref<256x128xf32, #tpu.memory_space<vmem>>, vector<256x128xf32>,
    } else {
    }
    %c256_i32 = arith.constant 256 : i32
    %15 = arith.muli %arg2, %c256_i32 : i32
    %16 = tpu.assume_multiple %15, 256 : i32
    %c0 = arith.constant 0 : index
    %c0_8 = arith.constant 0 : index
    %17 = vector.load %arg13[%c0, %c0_8] : memref<256x128xf32, #tpu.memory_space<vmem>>, vector<256x128xf32>
    %c0_9 = arith.constant 0 : index
    %c0_10 = arith.constant 0 : index
    %18 = vector.load %arg3[%c0_9, %c0_10] : memref<256x256xbf16, #tpu.memory_space<vmem>>, vector<256x256xbf16>
    %19 = arith.index_cast %16 : i32 to index
    %c0_11 = arith.constant 0 : index
    %20 = vector.load %arg12[%19, %c0_11] : memref<256x128xbf16, #tpu.memory_space<vmem>>, vector<256x128xbf16>
    %cst = arith.constant dense<0.000000e+00> : vector<256x128xf32>
    %21 = tpu.matmul %18, %20, %cst {dimension_numbers = #tpu.dot_dimension_numbers<[1], [0], [0], [1], [0, 0, 1, 1], [], []>} : vector<256x256xbf16>, vector<256x128xbf16>, vector<256x128xf32> -> vector<256x128xf32>
    %22 = arith.addf %17, %21 : vector<256x128xf32>
    %c0_12 = arith.constant 0 : index
    %c0_13 = arith.constant 0 : index
    %23 = vector.load %arg13[%c0_12, %c0_13] : memref<256x128xf32, #tpu.memory_space<vmem>>, vector<256x128xf32>
    tpu.vector_store %arg13[%c0_12, %c0_13], %22 {strides = array<i32>} : memref<256x128xf32, #tpu.memory_space<vmem>>, vector<256x128xf32>,
    %c0_i32_14 = arith.constant 0 : i32
    %24 = arith.cmpi eq, %arg2, %c0_i32_14 : i32
    %25 = arith.extui %24 : i1 to i32
    %c0_i32_15 = arith.constant 0 : i32
    %26 = arith.cmpi ne, %25, %c0_i32_15 : i32
    scf.if %26 {
      %c0_19 = arith.constant 0 : index
      %c0_20 = arith.constant 0 : index
      %34 = vector.load %arg13[%c0_19, %c0_20] : memref<256x128xf32, #tpu.memory_space<vmem>>, vector<256x128xf32>
      %c0_21 = arith.constant 0 : index
      %c0_22 = arith.constant 0 : index
      %c0_23 = arith.constant 0 : index
      %35 = vector.load %arg6[%c0_21, %c0_22, %c0_23] : memref<1x1x128xf32, #tpu.memory_space<vmem>>, vector<1x1x128xf32>
      %36 = vector.shape_cast %35 : vector<1x1x128xf32> to vector<1x128xf32>
      %37 = vector.broadcast %36 : vector<1x128xf32> to vector<256x128xf32>
      %38 = arith.addf %34, %37 : vector<256x128xf32>
      %c2_i32_24 = arith.constant 2 : i32
      %39 = arith.cmpi slt, %arg0, %c2_i32_24 : i32
      %cst_25 = arith.constant 0.000000e+00 : f32
      %40 = vector.broadcast %cst_25 : f32 to vector<256x128xf32>
      %41 = arith.maximumf %38, %40 : vector<256x128xf32>
      %42 = arith.select %39, %41, %38 : vector<256x128xf32>
      %c256_i32_26 = arith.constant 256 : i32
      %43 = arith.muli %arg1, %c256_i32_26 : i32
      %44 = tpu.assume_multiple %43, 256 : i32
      %45 = arith.index_cast %44 : i32 to index
      %c0_27 = arith.constant 0 : index
      %46 = vector.load %arg11[%45, %c0_27] : memref<256x128xf32, #tpu.memory_space<vmem>>, vector<256x128xf32>
      tpu.vector_store %arg11[%45, %c0_27], %42 {strides = array<i32>} : memref<256x128xf32, #tpu.memory_space<vmem>>, vector<256x128xf32>,
    } else {
    }
    %c2_i32 = arith.constant 2 : i32
    %27 = arith.cmpi eq, %arg0, %c2_i32 : i32
    %c0_i32_16 = arith.constant 0 : i32
    %28 = arith.cmpi eq, %arg1, %c0_i32_16 : i32
    %29 = arith.andi %27, %28 : i1
    %c0_i32_17 = arith.constant 0 : i32
    %30 = arith.cmpi eq, %arg2, %c0_i32_17 : i32
    %31 = arith.andi %29, %30 : i1
    %32 = arith.extui %31 : i1 to i32
    %c0_i32_18 = arith.constant 0 : i32
    %33 = arith.cmpi ne, %32, %c0_i32_18 : i32
    scf.if %33 {
      %c0_19 = arith.constant 0 : index
      %c0_20 = arith.constant 0 : index
      %34 = vector.load %arg7[%c0_19, %c0_20] : memref<8x256xf32, #tpu.memory_space<vmem>>, vector<8x256xf32>
      %c0_21 = arith.constant 0 : index
      %c0_22 = arith.constant 0 : index
      %35 = vector.load %arg11[%c0_21, %c0_22] : memref<256x128xf32, #tpu.memory_space<vmem>>, vector<256x128xf32>
      %cst_23 = arith.constant dense<0.000000e+00> : vector<8x128xf32>
      %36 = tpu.matmul %34, %35, %cst_23 {dimension_numbers = #tpu.dot_dimension_numbers<[1], [0], [0], [1], [0, 0, 1, 1], [], []>} : vector<8x256xf32>, vector<256x128xf32>, vector<8x128xf32> -> vector<8x128xf32>
      %c0_24 = arith.constant 0 : index
      %c0_25 = arith.constant 0 : index
      %37 = vector.load %arg8[%c0_24, %c0_25] : memref<128x128xf32, #tpu.memory_space<vmem>>, vector<128x128xf32>
      %cst_26 = arith.constant dense<0.000000e+00> : vector<8x128xf32>
      %38 = tpu.matmul %36, %37, %cst_26 {dimension_numbers = #tpu.dot_dimension_numbers<[1], [0], [0], [1], [0, 0, 1, 1], [], []>} : vector<8x128xf32>, vector<128x128xf32>, vector<8x128xf32> -> vector<8x128xf32>
      %c0_27 = arith.constant 0 : index
      %c0_28 = arith.constant 0 : index
      %39 = vector.load %arg9[%c0_27, %c0_28] : memref<1x128xf32, #tpu.memory_space<vmem>>, vector<1x128xf32>
      %40 = vector.broadcast %39 : vector<1x128xf32> to vector<8x128xf32>
      %41 = arith.addf %38, %40 : vector<8x128xf32>
      %c0_29 = arith.constant 0 : index
      %c0_30 = arith.constant 0 : index
      %42 = vector.load %arg10[%c0_29, %c0_30] : memref<8x128xf32, #tpu.memory_space<vmem>>, vector<8x128xf32>
      tpu.vector_store %arg10[%c0_29, %c0_30], %41 {strides = array<i32>} : memref<8x128xf32, #tpu.memory_space<vmem>>, vector<8x128xf32>,
    } else {
    }
    return
  }
  func.func @transform_0(%arg0: i32, %arg1: i32, %arg2: i32) -> (i32, i32) {
    %c0_i32 = arith.constant 0 : i32
    return %arg1, %arg2 : i32, i32
  }
  func.func @transform_1(%arg0: i32, %arg1: i32, %arg2: i32) -> (i32, i32) {
    %c0_i32 = arith.constant 0 : i32
    %c0_i32_0 = arith.constant 0 : i32
    %c0_i32_1 = arith.constant 0 : i32
    return %c0_i32, %c0_i32_0 : i32, i32
  }
  func.func @transform_2(%arg0: i32, %arg1: i32, %arg2: i32) -> (i32, i32, i32) {
    %c0_i32 = arith.constant 0 : i32
    %c0_i32_0 = arith.constant 0 : i32
    %c0_i32_1 = arith.constant 0 : i32
    return %arg0, %c0_i32, %c0_i32_0 : i32, i32, i32
  }
  func.func @transform_3(%arg0: i32, %arg1: i32, %arg2: i32) -> (i32, i32, i32) {
    %c0_i32 = arith.constant 0 : i32
    %c0_i32_0 = arith.constant 0 : i32
    %c0_i32_1 = arith.constant 0 : i32
    return %arg0, %c0_i32, %c0_i32_0 : i32, i32, i32
  }
  func.func @transform_4(%arg0: i32, %arg1: i32, %arg2: i32) -> (i32, i32) {
    %c0_i32 = arith.constant 0 : i32
    %c0_i32_0 = arith.constant 0 : i32
    %c0_i32_1 = arith.constant 0 : i32
    return %c0_i32, %c0_i32_0 : i32, i32
  }
  func.func @transform_5(%arg0: i32, %arg1: i32, %arg2: i32) -> (i32, i32) {
    %c0_i32 = arith.constant 0 : i32
    %c0_i32_0 = arith.constant 0 : i32
    %c0_i32_1 = arith.constant 0 : i32
    return %c0_i32, %c0_i32_0 : i32, i32
  }
  func.func @transform_6(%arg0: i32, %arg1: i32, %arg2: i32) -> (i32, i32) {
    %c0_i32 = arith.constant 0 : i32
    %c0_i32_0 = arith.constant 0 : i32
    %c0_i32_1 = arith.constant 0 : i32
    return %c0_i32, %c0_i32_0 : i32, i32
  }
  func.func @transform_7(%arg0: i32, %arg1: i32, %arg2: i32) -> (i32, i32) {
    %c0_i32 = arith.constant 0 : i32
    %c0_i32_0 = arith.constant 0 : i32
    %c0_i32_1 = arith.constant 0 : i32
    return %c0_i32, %c0_i32_0 : i32, i32
  }
}

</mosaic_0001>

<llo_original>
// kernel: tpu_custom_call.1
$region0: #{tpu_custom_call.1}
  #allocation0 [shape = 'u32[]', space=smem, size = 0x4, offset = 0x4, fixed_abs, tag = 'smem constant byte address 0x4 - core index']
  #allocation1 [shape = 'u32[144,128]{1,0:T(1,128)}', space=vmem, size = 0x12000, scoped, tag = 'internal scratch']
  #allocation2 [shape = 'f32[256,128]{1,0:T(8,128)}', space=vmem, size = 0x20000, scoped, tag = 'scratch operand']
  #allocation3 [shape = 'bf16[256,128]{1,0:T(16,128)(2,1)}', space=vmem, size = 0x10000, scoped, tag = 'scratch operand']
  #allocation4 [shape = 'f32[256,128]{1,0:T(8,128)}', space=vmem, size = 0x20000, scoped, tag = 'scratch operand']
  %s0 = inlined_call_operand.hbm [shape: bf16[256,256], index: 0, kind: input, shape index: {}]
  %s1 = inlined_call_operand.hbm [shape: f32[256,128], index: 1, kind: input, shape index: {}]
  %s2 = inlined_call_operand.hbm [shape: f32[3,128,128], index: 2, kind: input, shape index: {}]
  %s3 = inlined_call_operand.vmem [shape: f32[3,1,128], index: 3, kind: input, shape index: {}]
  %s4 = inlined_call_operand.hbm [shape: f32[8,256], index: 4, kind: input, shape index: {}]
  %s5 = inlined_call_operand.hbm [shape: f32[128,128], index: 5, kind: input, shape index: {}]
  %s6 = inlined_call_operand.vmem [shape: f32[1,128], index: 6, kind: input, shape index: {}]
  %s7 = inlined_call_operand.hbm [shape: f32[8,128], index: 7, kind: output, shape index: {}]
  %s8 = sld [smem:[#allocation0]]
  $region101: #{tpu_custom_call.1} parent=0
    _
  %s10 = ssub.s32 1, %s8
  %s11 = scalar_select 0, %s10, %s8
  $region1: #{tpu_custom_call.1} parent=0
    #allocation5 [shape = 'u8[131072]{0}', space=vmem, size = 0x20000, scoped, tag = 'input window, operand 0, single buffered']
    #allocation6 [shape = 's32[2]{0}', space=sflag, size = 0x8, scoped, tag = 'scoped memory for tpu_custom_call.1']
    #allocation7 [shape = 's32[2]{0}', space=sflag, size = 0x8, scoped, tag = 'scoped memory for tpu_custom_call.1']
    #allocation8 [shape = 'u8[131072]{0}', space=vmem, size = 0x20000, scoped, tag = 'input window, operand 1, single buffered']
    #allocation9 [shape = 's32[1]{0}', space=sflag, size = 0x4, scoped, tag = 'scoped memory for tpu_custom_call.1']
    #allocation10 [shape = 'u8[131072]{0}', space=vmem, size = 0x20000, scoped, tag = 'input window, operand 2']
    #allocation11 [shape = 'u8[8192]{0}', space=vmem, size = 0x2000, scoped, tag = 'input window, operand 4, single buffered']
    #allocation12 [shape = 'u8[65536]{0}', space=vmem, size = 0x10000, scoped, tag = 'input window, operand 5, single buffered']
    #allocation13 [shape = 's32[1]{0}', space=sflag, size = 0x4, scoped, tag = 'scoped memory for tpu_custom_call.1']
    #allocation14 [shape = 'u8[4096]{0}', space=vmem, size = 0x1000, scoped, tag = 'output window, operand 0, single buffered']
    %12 = vsyncpa [#allocation6], 0
    %13 = vsyncpa [#allocation9], 0
    %14 = vsyncpa [#allocation13], 0
    %15 = vsyncpa [#allocation7], 0
    loop: start=0, step=1, limit=5
    $region2: #{tpu_custom_call.1} parent=1 // loop_pre_header
      _
    $region3: #{tpu_custom_call.1} parent=1 // loop_header
      %s17 = sphi 0, %s21
      %p18 = scmp.ge.s32.totalorder %s17, 5
      %s24 = sphi 0, %s43
      %s25 = sphi 0, %s39
      %s26 = sphi 0, %s35
      %s27 = sphi 0, %s24
      %s28 = sphi 0, %s25
      %s29 = sphi 0, %s26
      %s30 = sphi 0, %s27
      %s31 = sphi 0, %s28
      %s32 = sphi 0, %s29
      %s48 = sphi 0, %s50
      %s51 = sphi 0, %s48
      %s52 = sphi 0, %s51
      %s68 = sphi 0, %s52
      %s72 = sphi 0, %s72
      %s74 = sphi 0, %s72
      %s75 = sphi 0, %s74
      %s89 = sphi 0, %s75
      %s95 = sphi 0, %s97
      %s98 = sphi 0, %s95
      %s99 = sphi 0, %s98
      %s115 = sphi 0, %s99
      %s121 = sphi 0, %s123
      %s124 = sphi 0, %s121
      %s125 = sphi 0, %s124
      %s141 = sphi 0, %s125
      %s145 = sphi 0, %s145
      %s147 = sphi 0, %s145
      %s148 = sphi 0, %s147
      %s162 = sphi 0, %s148
      %s166 = sphi 0, %s166
      %s168 = sphi 0, %s166
      %s169 = sphi 0, %s168
      %s183 = sphi 0, %s169
      %s187 = sphi 0, %s187
      %s189 = sphi 0, %s187
      %s190 = sphi 0, %s189
      %s204 = sphi 0, %s190
      %s208 = sphi 0, %s208
      %s210 = sphi 0, %s208
      %s211 = sphi 0, %s210
      %s225 = sphi 0, %s211
    $region4: #{tpu_custom_call.1} parent=1 // loop_header_branch
      %20 = sbr.rel (%p18) target = $region8
    $region5: #{tpu_custom_call.1} parent=1 // loop_body
      %s22 = ssub.s32 %s17, 1
      %s23 = ssub.s32 %s17, 2
      %s33 = sadd.s32 1, %s26
      %p34 = scmp.ge.s32.totalorder %s33, 1
      %s35 = scalar_select %p34, 0, %s33
      %s36 = sadd.s32 1, %s25
      %s37 = scalar_select %p34, %s36, %s25
      %p38 = scmp.ge.s32.totalorder %s37, 1
      %s39 = scalar_select %p38, 0, %s37
      %s40 = sadd.s32 1, %s24
      %s41 = scalar_select %p38, %s40, %s24
      %p42 = scmp.ge.s32.totalorder %s41, 3
      %s43 = scalar_select %p42, 0, %s41
      %s44 = ssub.s32 %s25, %s39
      %s45 = ssub.s32 %s26, %s35
      %s46 = sor.u32 %s44, %s45
      %p47 = scmp.eq.s32.totalorder %s46, 0
      %s49 = sadd.s32 %s48, 1
      %s50 = scalar_select %p47, %s48, %s49
      %p53 = pneg %p47
      %p54 = scmp.eq.s32.totalorder %s17, 2
      %p55 = por %p53, %p54
      %p56 = scmp.ne.s32.totalorder %s48, %s51
      %p57 = scmp.eq.s32.totalorder %s17, 0
      %p58 = por %p56, %p57
      %p59 = scmp.ne.s32.totalorder %s48, %s51
      %p60 = scmp.eq.s32.totalorder %s22, 2
      %p61 = por %p59, %p60
      %p62 = scmp.ne.s32.totalorder %s51, %s52
      %p63 = scmp.eq.s32.totalorder %s22, 0
      %p64 = por %p62, %p63
      %p65 = scmp.ne.s32.totalorder %s51, %s52
      %p66 = scmp.eq.s32.totalorder %s23, 2
      %p67 = por %p65, %p66
      %p69 = scmp.ne.s32.totalorder %s52, %s68
      %p70 = scmp.eq.s32.totalorder %s23, 0
      %p71 = por %p69, %p70
      %s73 = sadd.s32 %s72, 1
      %p76 = scmp.eq.s32.totalorder %s17, 2
      %p77 = scmp.ne.s32.totalorder %s72, %s74
      %p78 = scmp.eq.s32.totalorder %s17, 0
      %p79 = por %p77, %p78
      %p80 = scmp.ne.s32.totalorder %s72, %s74
      %p81 = scmp.eq.s32.totalorder %s22, 2
      %p82 = por %p80, %p81
      %p83 = scmp.ne.s32.totalorder %s74, %s75
      %p84 = scmp.eq.s32.totalorder %s22, 0
      %p85 = por %p83, %p84
      %p86 = scmp.ne.s32.totalorder %s74, %s75
      %p87 = scmp.eq.s32.totalorder %s23, 2
      %p88 = por %p86, %p87
      %p90 = scmp.ne.s32.totalorder %s75, %s89
      %p91 = scmp.eq.s32.totalorder %s23, 0
      %p92 = por %p90, %p91
      %s93 = ssub.s32 %s24, %s43
      %p94 = scmp.eq.s32.totalorder %s93, 0
      %s96 = sadd.s32 %s95, 1
      %s97 = scalar_select %p94, %s95, %s96
      %p100 = pneg %p94
      %p101 = scmp.eq.s32.totalorder %s17, 2
      %p102 = por %p100, %p101
      %p103 = scmp.ne.s32.totalorder %s95, %s98
      %p104 = scmp.eq.s32.totalorder %s17, 0
      %p105 = por %p103, %p104
      %p106 = scmp.ne.s32.totalorder %s95, %s98
      %p107 = scmp.eq.s32.totalorder %s22, 2
      %p108 = por %p106, %p107
      %p109 = scmp.ne.s32.totalorder %s98, %s99
      %p110 = scmp.eq.s32.totalorder %s22, 0
      %p111 = por %p109, %p110
      %p112 = scmp.ne.s32.totalorder %s98, %s99
      %p113 = scmp.eq.s32.totalorder %s23, 2
      %p114 = por %p112, %p113
      %p116 = scmp.ne.s32.totalorder %s99, %s115
      %p117 = scmp.eq.s32.totalorder %s23, 0
      %p118 = por %p116, %p117
      %s119 = ssub.s32 %s24, %s43
      %p120 = scmp.eq.s32.totalorder %s119, 0
      %s122 = sadd.s32 %s121, 1
      %s123 = scalar_select %p120, %s121, %s122
      %p126 = pneg %p120
      %p127 = scmp.eq.s32.totalorder %s17, 2
      %p128 = por %p126, %p127
      %p129 = scmp.ne.s32.totalorder %s121, %s124
      %p130 = scmp.eq.s32.totalorder %s17, 0
      %p131 = por %p129, %p130
      %p132 = scmp.ne.s32.totalorder %s121, %s124
      %p133 = scmp.eq.s32.totalorder %s22, 2
      %p134 = por %p132, %p133
      %p135 = scmp.ne.s32.totalorder %s124, %s125
      %p136 = scmp.eq.s32.totalorder %s22, 0
      %p137 = por %p135, %p136
      %p138 = scmp.ne.s32.totalorder %s124, %s125
      %p139 = scmp.eq.s32.totalorder %s23, 2
      %p140 = por %p138, %p139
      %p142 = scmp.ne.s32.totalorder %s125, %s141
      %p143 = scmp.eq.s32.totalorder %s23, 0
      %p144 = por %p142, %p143
      %s146 = sadd.s32 %s145, 1
      %p149 = scmp.eq.s32.totalorder %s17, 2
      %p150 = scmp.ne.s32.totalorder %s145, %s147
      %p151 = scmp.eq.s32.totalorder %s17, 0
      %p152 = por %p150, %p151
      %p153 = scmp.ne.s32.totalorder %s145, %s147
      %p154 = scmp.eq.s32.totalorder %s22, 2
      %p155 = por %p153, %p154
      %p156 = scmp.ne.s32.totalorder %s147, %s148
      %p157 = scmp.eq.s32.totalorder %s22, 0
      %p158 = por %p156, %p157
      %p159 = scmp.ne.s32.totalorder %s147, %s148
      %p160 = scmp.eq.s32.totalorder %s23, 2
      %p161 = por %p159, %p160
      %p163 = scmp.ne.s32.totalorder %s148, %s162
      %p164 = scmp.eq.s32.totalorder %s23, 0
      %p165 = por %p163, %p164
      %s167 = sadd.s32 %s166, 1
      %p170 = scmp.eq.s32.totalorder %s17, 2
      %p171 = scmp.ne.s32.totalorder %s166, %s168
      %p172 = scmp.eq.s32.totalorder %s17, 0
      %p173 = por %p171, %p172
      %p174 = scmp.ne.s32.totalorder %s166, %s168
      %p175 = scmp.eq.s32.totalorder %s22, 2
      %p176 = por %p174, %p175
      %p177 = scmp.ne.s32.totalorder %s168, %s169
      %p178 = scmp.eq.s32.totalorder %s22, 0
      %p179 = por %p177, %p178
      %p180 = scmp.ne.s32.totalorder %s168, %s169
      %p181 = scmp.eq.s32.totalorder %s23, 2
      %p182 = por %p180, %p181
      %p184 = scmp.ne.s32.totalorder %s169, %s183
      %p185 = scmp.eq.s32.totalorder %s23, 0
      %p186 = por %p184, %p185
      %s188 = sadd.s32 %s187, 1
      %p191 = scmp.eq.s32.totalorder %s17, 2
      %p192 = scmp.ne.s32.totalorder %s187, %s189
      %p193 = scmp.eq.s32.totalorder %s17, 0
      %p194 = por %p192, %p193
      %p195 = scmp.ne.s32.totalorder %s187, %s189
      %p196 = scmp.eq.s32.totalorder %s22, 2
      %p197 = por %p195, %p196
      %p198 = scmp.ne.s32.totalorder %s189, %s190
      %p199 = scmp.eq.s32.totalorder %s22, 0
      %p200 = por %p198, %p199
      %p201 = scmp.ne.s32.totalorder %s189, %s190
      %p202 = scmp.eq.s32.totalorder %s23, 2
      %p203 = por %p201, %p202
      %p205 = scmp.ne.s32.totalorder %s190, %s204
      %p206 = scmp.eq.s32.totalorder %s23, 0
      %p207 = por %p205, %p206
      %s209 = sadd.s32 %s208, 1
      %p212 = scmp.eq.s32.totalorder %s17, 2
      %p213 = scmp.ne.s32.totalorder %s208, %s210
      %p214 = scmp.eq.s32.totalorder %s17, 0
      %p215 = por %p213, %p214
      %p216 = scmp.ne.s32.totalorder %s208, %s210
      %p217 = scmp.eq.s32.totalorder %s22, 2
      %p218 = por %p216, %p217
      %p219 = scmp.ne.s32.totalorder %s210, %s211
      %p220 = scmp.eq.s32.totalorder %s22, 0
      %p221 = por %p219, %p220
      %p222 = scmp.ne.s32.totalorder %s210, %s211
      %p223 = scmp.eq.s32.totalorder %s23, 2
      %p224 = por %p222, %p223
      %p226 = scmp.ne.s32.totalorder %s211, %s225
      %p227 = scmp.eq.s32.totalorder %s23, 0
      %p228 = por %p226, %p227
      %p229 = scmp.le.s32.totalorder 1, %s17
      %p230 = scmp.lt.s32.totalorder %s17, 4
      %p231 = pnand %p229, %p230
      %p232 = pneg %p231
      // Predicated region
      $region9: #{tpu_custom_call.1} parent=5 // pred_check
        _
      $region10: #{tpu_custom_call.1} parent=5 // pred_check_branch
        %234 = sbr.rel (%p231) target = $region12
      $region11: #{tpu_custom_call.1} parent=5 // pred_region
        %s235 = ssub.s32 %s17, 1
        // Predicated region
        $region13: #{tpu_custom_call.1} parent=11 // pred_check
          %p236 = pneg %p64
        $region14: #{tpu_custom_call.1} parent=11 // pred_check_branch
          %238 = sbr.rel (%p236) target = $region16
        $region15: #{tpu_custom_call.1} parent=11 // pred_region
          %s239 = smul.u32 32, %s28
          %s240 = smul.u32 2, %s29
          %s242 = ssub.s32 4096, 4096
          %243 = vsyncadd [#allocation6], %s242
          %s244 = smul.addr %s239, 2
          %s245 = sadd.s32 %s240, %s244
          %s246 = smul.addr %s245, 64
          %s247 = scalar_lea.hbm %s0, %s246
          %s248 = sshll.u32 [#allocation5], 4
          %s249 = int_to_ptr.vmem [resolvable:$true] %s248
          %254 = dma.hbm_to_vmem [thread:$0]  %s247, 4096, %s249, [#allocation6], 128, 128, 8
        $region16: #{tpu_custom_call.1} parent=11 // pred_fallthru
          _
        // Predicated region
        $region17: #{tpu_custom_call.1} parent=11 // pred_check
          %p255 = pneg %p85
        $region18: #{tpu_custom_call.1} parent=11 // pred_check_branch
          %257 = sbr.rel (%p255) target = $region20
        $region19: #{tpu_custom_call.1} parent=11 // pred_region
          %s259 = ssub.s32 4096, 4096
          %260 = vsyncadd [#allocation9], %s259
          %s261 = sshll.u32 [#allocation8], 4
          %s262 = int_to_ptr.vmem [resolvable:$true] %s261
          %267 = dma.hbm_to_vmem [thread:$0]  %s1, 4096, %s262, [#allocation9], 128, 128, 8
        $region20: #{tpu_custom_call.1} parent=11 // pred_fallthru
          _
        // Predicated region
        $region21: #{tpu_custom_call.1} parent=11 // pred_check
          %p268 = pneg %p158
        $region22: #{tpu_custom_call.1} parent=11 // pred_check_branch
          %270 = sbr.rel (%p268) target = $region24
        $region23: #{tpu_custom_call.1} parent=11 // pred_region
          %s272 = ssub.s32 256, 256
          %273 = vsyncadd [#allocation9], %s272
          %s275 = sshll.u32 [#allocation11], 4
          %s276 = int_to_ptr.vmem [resolvable:$true] %s275
          %278 = dma.hbm_to_vmem [thread:$0]  %s4, 256, %s276, [#allocation9]
        $region24: #{tpu_custom_call.1} parent=11 // pred_fallthru
          _
        // Predicated region
        $region25: #{tpu_custom_call.1} parent=11 // pred_check
          %p279 = pneg %p179
        $region26: #{tpu_custom_call.1} parent=11 // pred_check_branch
          %281 = sbr.rel (%p279) target = $region28
        $region27: #{tpu_custom_call.1} parent=11 // pred_region
          %s283 = ssub.s32 2048, 2048
          %284 = vsyncadd [#allocation13], %s283
          %s285 = sshll.u32 [#allocation12], 4
          %s286 = int_to_ptr.vmem [resolvable:$true] %s285
          %291 = dma.hbm_to_vmem [thread:$0]  %s5, 2048, %s286, [#allocation13], 128, 128, 8
        $region28: #{tpu_custom_call.1} parent=11 // pred_fallthru
          _
        // Predicated region
        $region29: #{tpu_custom_call.1} parent=11 // pred_check
          %p292 = pneg %p200
        $region30: #{tpu_custom_call.1} parent=11 // pred_check_branch
          %294 = sbr.rel (%p292) target = $region32
        $region31: #{tpu_custom_call.1} parent=11 // pred_region
          _
        $region32: #{tpu_custom_call.1} parent=11 // pred_fallthru
          _
      $region12: #{tpu_custom_call.1} parent=5 // pred_fallthru
        _
      %p295 = scmp.lt.s32.totalorder %s17, 3
      // Predicated region
      $region33: #{tpu_custom_call.1} parent=5 // pred_check
        %p296 = pneg %p295
      $region34: #{tpu_custom_call.1} parent=5 // pred_check_branch
        %298 = sbr.rel (%p296) target = $region36
      $region35: #{tpu_custom_call.1} parent=5 // pred_region
        // Predicated region
        $region37: #{tpu_custom_call.1} parent=35 // pred_check
          %p299 = pneg %p105
        $region38: #{tpu_custom_call.1} parent=35 // pred_check_branch
          %301 = sbr.rel (%p299) target = $region40
        $region39: #{tpu_custom_call.1} parent=35 // pred_region
          %s302 = sand.u32 %s17, 1
          %s303 = scalar_lea.sflag [#allocation6], %s302
          %s304 = sand.u32 %s95, 1
          %s305 = smul.addr %s304, 128
          %s306 = scalar_lea.vmem [#allocation10], %s305
          %s308 = ssub.s32 2048, 2048
          %309 = vsyncadd %s303, %s308
          %s310 = smul.addr %s24, 16
          %s311 = smul.addr %s310, 128
          %s312 = scalar_lea.hbm %s2, %s311
          %s313 = sshll.u32 %s306, 4
          %s314 = int_to_ptr.vmem [resolvable:$true] %s313
          %319 = dma.hbm_to_vmem [thread:$0]  %s312, 2048, %s314, %s303, 128, 128, 8
        $region40: #{tpu_custom_call.1} parent=35 // pred_fallthru
          _
        // Predicated region
        $region41: #{tpu_custom_call.1} parent=35 // pred_check
          %p320 = pneg %p131
        $region42: #{tpu_custom_call.1} parent=35 // pred_check_branch
          %322 = sbr.rel (%p320) target = $region44
        $region43: #{tpu_custom_call.1} parent=35 // pred_region
          %p323 = scmp.lt.s32.totalorder %s24, 2
          %s324 = scalar_select %p323, %s24, 2
          %s325 = scalar_lea.vmem %s3, %s324
        $region44: #{tpu_custom_call.1} parent=35 // pred_fallthru
          _
      $region36: #{tpu_custom_call.1} parent=5 // pred_fallthru
        _
      %p326 = scmp.le.s32.totalorder 1, %s17
      %p327 = scmp.lt.s32.totalorder %s17, 4
      %p328 = pnand %p326, %p327
      %p329 = pneg %p328
      // Predicated region
      $region45: #{tpu_custom_call.1} parent=5 // pred_check
        _
      $region46: #{tpu_custom_call.1} parent=5 // pred_check_branch
        %331 = sbr.rel (%p328) target = $region48
      $region47: #{tpu_custom_call.1} parent=5 // pred_region
        %s332 = ssub.s32 %s17, 1
        // Predicated region
        $region49: #{tpu_custom_call.1} parent=47 // pred_check
          %p333 = pneg %p64
        $region50: #{tpu_custom_call.1} parent=47 // pred_check_branch
          %335 = sbr.rel (%p333) target = $region52
        $region51: #{tpu_custom_call.1} parent=47 // pred_region
          %336 = dma.done [#allocation6], 4096
        $region52: #{tpu_custom_call.1} parent=47 // pred_fallthru
          _
        // Predicated region
        $region53: #{tpu_custom_call.1} parent=47 // pred_check
          %p337 = pneg %p85
        $region54: #{tpu_custom_call.1} parent=47 // pred_check_branch
          %339 = sbr.rel (%p337) target = $region56
        $region55: #{tpu_custom_call.1} parent=47 // pred_region
          %340 = dma.done [#allocation9], 4096
        $region56: #{tpu_custom_call.1} parent=47 // pred_fallthru
          _
        %s341 = sand.u32 %s22, 1
        %s342 = scalar_lea.sflag [#allocation6], %s341
        %s343 = sand.u32 %s98, 1
        %s344 = smul.addr %s343, 128
        %s345 = scalar_lea.vmem [#allocation10], %s344
        // Predicated region
        $region57: #{tpu_custom_call.1} parent=47 // pred_check
          %p346 = pneg %p111
        $region58: #{tpu_custom_call.1} parent=47 // pred_check_branch
          %348 = sbr.rel (%p346) target = $region60
        $region59: #{tpu_custom_call.1} parent=47 // pred_region
          %349 = dma.done %s342, 2048
        $region60: #{tpu_custom_call.1} parent=47 // pred_fallthru
          _
        // Predicated region
        $region61: #{tpu_custom_call.1} parent=47 // pred_check
          %p350 = pneg %p158
        $region62: #{tpu_custom_call.1} parent=47 // pred_check_branch
          %352 = sbr.rel (%p350) target = $region64
        $region63: #{tpu_custom_call.1} parent=47 // pred_region
          %353 = dma.done [#allocation9], 256
        $region64: #{tpu_custom_call.1} parent=47 // pred_fallthru
          _
        // Predicated region
        $region65: #{tpu_custom_call.1} parent=47 // pred_check
          %p354 = pneg %p179
        $region66: #{tpu_custom_call.1} parent=47 // pred_check_branch
          %356 = sbr.rel (%p354) target = $region68
        $region67: #{tpu_custom_call.1} parent=47 // pred_region
          %357 = dma.done [#allocation13], 2048
        $region68: #{tpu_custom_call.1} parent=47 // pred_fallthru
          _
        %p358 = pneg %p64
        %p359 = pneg %p61
        %p360 = pneg %p85
        %p361 = pneg %p82
        %s362 = sand.u32 %s22, 1
        %s363 = scalar_lea.sflag [#allocation6], %s362
        %s364 = sand.u32 %s98, 1
        %s365 = smul.addr %s364, 128
        %s366 = scalar_lea.vmem [#allocation10], %s365
        %p367 = pneg %p111
        %p368 = pneg %p108
        %p369 = scmp.lt.s32.totalorder %s27, 2
        %s370 = scalar_select %p369, %s27, 2
        %s371 = scalar_lea.vmem %s3, %s370
        %p372 = pneg %p137
        %p373 = pneg %p134
        %p374 = pneg %p158
        %p375 = pneg %p155
        %p376 = pneg %p179
        %p377 = pneg %p176
        %p378 = pneg %p200
        %p379 = pneg %p197
        %p380 = pneg %p221
        %p381 = pneg %p218
        %s382 = smul.u32 32, %s28
        %s383 = smul.u32 2, %s29
        %p384 = scmp.lt.s32.totalorder %s27, 2
        %s385 = scalar_select %p384, %s27, 2
        %s386 = scalar_lea.vmem %s3, %s385
        %p388 = scmp.eq.s32.totalorder %s27, 0
        %p389 = scmp.eq.s32.totalorder %s28, 0
        %p390 = pnand %p388, %p389
        %p391 = pneg %p390
        %p392 = scmp.eq.s32.totalorder %s29, 0
        %p393 = pnand %p391, %p392
        %p394 = pneg %p393
        // Predicated region
        $region69: #{tpu_custom_call.1} parent=47 // pred_check
          _
        $region70: #{tpu_custom_call.1} parent=47 // pred_check_branch
          %396 = sbr.rel (%p393) target = $region72
        $region71: #{tpu_custom_call.1} parent=47 // pred_region
          %v397 = vld [vmem:[#allocation8] sm:$0xff]
          %v398 = vld [vmem:[#allocation8 + $0x8] sm:$0xff]
          %v399 = vld [vmem:[#allocation8 + $0x10] sm:$0xff]
          %v400 = vld [vmem:[#allocation8 + $0x18] sm:$0xff]
          %v401 = vld [vmem:[#allocation8 + $0x20] sm:$0xff]
          %v402 = vld [vmem:[#allocation8 + $0x28] sm:$0xff]
          %v403 = vld [vmem:[#allocation8 + $0x30] sm:$0xff]
          %v404 = vld [vmem:[#allocation8 + $0x38] sm:$0xff]
          %v405 = vld [vmem:[#allocation8 + $0x40] sm:$0xff]
          %v406 = vld [vmem:[#allocation8 + $0x48] sm:$0xff]
          %v407 = vld [vmem:[#allocation8 + $0x50] sm:$0xff]
          %v408 = vld [vmem:[#allocation8 + $0x58] sm:$0xff]
          %v409 = vld [vmem:[#allocation8 + $0x60] sm:$0xff]
          %v410 = vld [vmem:[#allocation8 + $0x68] sm:$0xff]
          %v411 = vld [vmem:[#allocation8 + $0x70] sm:$0xff]
          %v412 = vld [vmem:[#allocation8 + $0x78] sm:$0xff]
          %v413 = vld [vmem:[#allocation8 + $0x80] sm:$0xff]
          %v414 = vld [vmem:[#allocation8 + $0x88] sm:$0xff]
          %v415 = vld [vmem:[#allocation8 + $0x90] sm:$0xff]
          %v416 = vld [vmem:[#allocation8 + $0x98] sm:$0xff]
          %v417 = vld [vmem:[#allocation8 + $0xa0] sm:$0xff]
          %v418 = vld [vmem:[#allocation8 + $0xa8] sm:$0xff]
          %v419 = vld [vmem:[#allocation8 + $0xb0] sm:$0xff]
          %v420 = vld [vmem:[#allocation8 + $0xb8] sm:$0xff]
          %v421 = vld [vmem:[#allocation8 + $0xc0] sm:$0xff]
          %v422 = vld [vmem:[#allocation8 + $0xc8] sm:$0xff]
          %v423 = vld [vmem:[#allocation8 + $0xd0] sm:$0xff]
          %v424 = vld [vmem:[#allocation8 + $0xd8] sm:$0xff]
          %v425 = vld [vmem:[#allocation8 + $0xe0] sm:$0xff]
          %v426 = vld [vmem:[#allocation8 + $0xe8] sm:$0xff]
          %v427 = vld [vmem:[#allocation8 + $0xf0] sm:$0xff]
          %v428 = vld [vmem:[#allocation8 + $0xf8] sm:$0xff]
          %429 = vst [vmem:[#allocation2] sm:$0xff] %v397
          %430 = vst [vmem:[#allocation2 + $0x8] sm:$0xff] %v398
          %431 = vst [vmem:[#allocation2 + $0x10] sm:$0xff] %v399
          %432 = vst [vmem:[#allocation2 + $0x18] sm:$0xff] %v400
          %433 = vst [vmem:[#allocation2 + $0x20] sm:$0xff] %v401
          %434 = vst [vmem:[#allocation2 + $0x28] sm:$0xff] %v402
          %435 = vst [vmem:[#allocation2 + $0x30] sm:$0xff] %v403
          %436 = vst [vmem:[#allocation2 + $0x38] sm:$0xff] %v404
          %437 = vst [vmem:[#allocation2 + $0x40] sm:$0xff] %v405
          %438 = vst [vmem:[#allocation2 + $0x48] sm:$0xff] %v406
          %439 = vst [vmem:[#allocation2 + $0x50] sm:$0xff] %v407
          %440 = vst [vmem:[#allocation2 + $0x58] sm:$0xff] %v408
          %441 = vst [vmem:[#allocation2 + $0x60] sm:$0xff] %v409
          %442 = vst [vmem:[#allocation2 + $0x68] sm:$0xff] %v410
          %443 = vst [vmem:[#allocation2 + $0x70] sm:$0xff] %v411
          %444 = vst [vmem:[#allocation2 + $0x78] sm:$0xff] %v412
          %445 = vst [vmem:[#allocation2 + $0x80] sm:$0xff] %v413
          %446 = vst [vmem:[#allocation2 + $0x88] sm:$0xff] %v414
          %447 = vst [vmem:[#allocation2 + $0x90] sm:$0xff] %v415
          %448 = vst [vmem:[#allocation2 + $0x98] sm:$0xff] %v416
          %449 = vst [vmem:[#allocation2 + $0xa0] sm:$0xff] %v417
          %450 = vst [vmem:[#allocation2 + $0xa8] sm:$0xff] %v418
          %451 = vst [vmem:[#allocation2 + $0xb0] sm:$0xff] %v419
          %452 = vst [vmem:[#allocation2 + $0xb8] sm:$0xff] %v420
          %453 = vst [vmem:[#allocation2 + $0xc0] sm:$0xff] %v421
          %454 = vst [vmem:[#allocation2 + $0xc8] sm:$0xff] %v422
          %455 = vst [vmem:[#allocation2 + $0xd0] sm:$0xff] %v423
          %456 = vst [vmem:[#allocation2 + $0xd8] sm:$0xff] %v424
          %457 = vst [vmem:[#allocation2 + $0xe0] sm:$0xff] %v425
          %458 = vst [vmem:[#allocation2 + $0xe8] sm:$0xff] %v426
          %459 = vst [vmem:[#allocation2 + $0xf0] sm:$0xff] %v427
          %460 = vst [vmem:[#allocation2 + $0xf8] sm:$0xff] %v428
        $region72: #{tpu_custom_call.1} parent=47 // pred_fallthru
          _
        %p461 = pnand %p389, %p392
        %p462 = pneg %p461
        // Predicated region
        $region73: #{tpu_custom_call.1} parent=47 // pred_check
          _
        $region74: #{tpu_custom_call.1} parent=47 // pred_check_branch
          %464 = sbr.rel (%p461) target = $region76
        $region75: #{tpu_custom_call.1} parent=47 // pred_region
          %v465 = vld [vmem:[#allocation2] sm:$0xff]
          %v466 = vld [vmem:[#allocation2 + $0x8] sm:$0xff]
          %v467 = vld [vmem:[#allocation2 + $0x10] sm:$0xff]
          %v468 = vld [vmem:[#allocation2 + $0x18] sm:$0xff]
          %v469 = vld [vmem:[#allocation2 + $0x20] sm:$0xff]
          %v470 = vld [vmem:[#allocation2 + $0x28] sm:$0xff]
          %v471 = vld [vmem:[#allocation2 + $0x30] sm:$0xff]
          %v472 = vld [vmem:[#allocation2 + $0x38] sm:$0xff]
          %v473 = vld [vmem:[#allocation2 + $0x40] sm:$0xff]
          %v474 = vld [vmem:[#allocation2 + $0x48] sm:$0xff]
          %v475 = vld [vmem:[#allocation2 + $0x50] sm:$0xff]
          %v476 = vld [vmem:[#allocation2 + $0x58] sm:$0xff]
          %v477 = vld [vmem:[#allocation2 + $0x60] sm:$0xff]
          %v478 = vld [vmem:[#allocation2 + $0x68] sm:$0xff]
          %v479 = vld [vmem:[#allocation2 + $0x70] sm:$0xff]
          %v480 = vld [vmem:[#allocation2 + $0x78] sm:$0xff]
          %v481 = vld [vmem:[#allocation2 + $0x80] sm:$0xff]
          %v482 = vld [vmem:[#allocation2 + $0x88] sm:$0xff]
          %v483 = vld [vmem:[#allocation2 + $0x90] sm:$0xff]
          %v484 = vld [vmem:[#allocation2 + $0x98] sm:$0xff]
          %v485 = vld [vmem:[#allocation2 + $0xa0] sm:$0xff]
          %v486 = vld [vmem:[#allocation2 + $0xa8] sm:$0xff]
          %v487 = vld [vmem:[#allocation2 + $0xb0] sm:$0xff]
          %v488 = vld [vmem:[#allocation2 + $0xb8] sm:$0xff]
          %v489 = vld [vmem:[#allocation2 + $0xc0] sm:$0xff]
          %v490 = vld [vmem:[#allocation2 + $0xc8] sm:$0xff]
          %v491 = vld [vmem:[#allocation2 + $0xd0] sm:$0xff]
          %v492 = vld [vmem:[#allocation2 + $0xd8] sm:$0xff]
          %v493 = vld [vmem:[#allocation2 + $0xe0] sm:$0xff]
          %v494 = vld [vmem:[#allocation2 + $0xe8] sm:$0xff]
          %v495 = vld [vmem:[#allocation2 + $0xf0] sm:$0xff]
          %v496 = vld [vmem:[#allocation2 + $0xf8] sm:$0xff]
          %v497 = vld [vmem:[%s345] sm:$0xff]
          %v498 = vld [vmem:[%s345 + $0x8] sm:$0xff]
          %v499 = vld [vmem:[%s345 + $0x10] sm:$0xff]
          %v500 = vld [vmem:[%s345 + $0x18] sm:$0xff]
          %v501 = vld [vmem:[%s345 + $0x20] sm:$0xff]
          %v502 = vld [vmem:[%s345 + $0x28] sm:$0xff]
          %v503 = vld [vmem:[%s345 + $0x30] sm:$0xff]
          %v504 = vld [vmem:[%s345 + $0x38] sm:$0xff]
          %v505 = vld [vmem:[%s345 + $0x40] sm:$0xff]
          %v506 = vld [vmem:[%s345 + $0x48] sm:$0xff]
          %v507 = vld [vmem:[%s345 + $0x50] sm:$0xff]
          %v508 = vld [vmem:[%s345 + $0x58] sm:$0xff]
          %v509 = vld [vmem:[%s345 + $0x60] sm:$0xff]
          %v510 = vld [vmem:[%s345 + $0x68] sm:$0xff]
          %v511 = vld [vmem:[%s345 + $0x70] sm:$0xff]
          %v512 = vld [vmem:[%s345 + $0x78] sm:$0xff]
          %513 = vmatprep.subr.mxu0 0.0
          %514 = vmatpush1.msra.mxu0 %v497
          %515 = vmatprep.subr.mxu0 0.0
          %516 = vmatpush1.msra.mxu0 %v498
          %517 = vmatprep.subr.mxu0 0.0
          %518 = vmatpush1.msra.mxu0 %v499
          %519 = vmatprep.subr.mxu0 0.0
          %520 = vmatpush1.msra.mxu0 %v500
          %521 = vmatprep.subr.mxu0 0.0
          %522 = vmatpush1.msra.mxu0 %v501
          %523 = vmatprep.subr.mxu0 0.0
          %524 = vmatpush1.msra.mxu0 %v502
          %525 = vmatprep.subr.mxu0 0.0
          %526 = vmatpush1.msra.mxu0 %v503
          %527 = vmatprep.subr.mxu0 0.0
          %528 = vmatpush1.msra.mxu0 %v504
          %529 = vmatprep.subr.mxu0 0.0
          %530 = vmatpush1.msra.mxu0 %v505
          %531 = vmatprep.subr.mxu0 0.0
          %532 = vmatpush1.msra.mxu0 %v506
          %533 = vmatprep.subr.mxu0 0.0
          %534 = vmatpush1.msra.mxu0 %v507
          %535 = vmatprep.subr.mxu0 0.0
          %536 = vmatpush1.msra.mxu0 %v508
          %537 = vmatprep.subr.mxu0 0.0
          %538 = vmatpush1.msra.mxu0 %v509
          %539 = vmatprep.subr.mxu0 0.0
          %540 = vmatpush1.msra.mxu0 %v510
          %541 = vmatprep.subr.mxu0 0.0
          %542 = vmatpush1.msra.mxu0 %v511
          %543 = vmatprep.subr.mxu0 0.0
          %544 = vmatpush1.msra.mxu0 %v512
          %545 = vmatprep.subr.mxu0 0.0
          %546 = vmatpush1.msra.mxu0 0.0
          %547 = vmatprep.subr.mxu0 0.0
          %548 = vmatpush1.msra.mxu0 0.0
          %549 = vmatprep.subr.mxu0 0.0
          %550 = vmatpush1.msra.mxu0 0.0
          %551 = vmatprep.subr.mxu0 0.0
          %552 = vmatpush1.msra.mxu0 0.0
          %553 = vmatprep.subr.mxu0 0.0
          %554 = vmatpush1.msra.mxu0 0.0
          %555 = vmatprep.subr.mxu0 0.0
          %556 = vmatpush1.msra.mxu0 0.0
          %557 = vmatprep.subr.mxu0 0.0
          %558 = vmatpush1.msra.mxu0 0.0
          %559 = vmatprep.subr.mxu0 0.0
          %560 = vmatpush1.msra.mxu0 0.0
          %561 = vmatprep.subr.mxu0 0.0
          %562 = vmatpush1.msra.mxu0 0.0
          %563 = vmatprep.subr.mxu0 0.0
          %564 = vmatpush1.msra.mxu0 0.0
          %565 = vmatprep.subr.mxu0 0.0
          %566 = vmatpush1.msra.mxu0 0.0
          %567 = vmatprep.subr.mxu0 0.0
          %568 = vmatpush1.msra.mxu0 0.0
          %569 = vmatprep.subr.mxu0 0.0
          %570 = vmatpush1.msra.mxu0 0.0
          %571 = vmatprep.subr.mxu0 0.0
          %572 = vmatpush1.msra.mxu0 0.0
          %573 = vmatprep.subr.mxu0 0.0
          %574 = vmatpush1.msra.mxu0 0.0
          %575 = vmatprep.subr.mxu0 0.0
          %576 = vmatpush1.msra.mxu0 0.0
          %577 = vmatprep.mubr.f32.mxu0 0.0
          %578 = vmatmul.mubr.f32.gmra.mrb[0].mxu0 %v465
          %v579 = vpop.f32.mrb[0].mxu0
          %v580 = vadd.f32 0.0, %v579
          %v581 = vpop.f32.mrb[0].mxu0
          %582 = vmatprep.mubr.f32.mxu0 0.0
          %583 = vmatmul.mubr.f32.gmra.mrb[0].mxu0 %v466
          %v584 = vpop.f32.mrb[0].mxu0
          %v585 = vadd.f32 0.0, %v584
          %v586 = vpop.f32.mrb[0].mxu0
          %587 = vmatprep.mubr.f32.mxu0 0.0
          %588 = vmatmul.mubr.f32.gmra.mrb[0].mxu0 %v467
          %v589 = vpop.f32.mrb[0].mxu0
          %v590 = vadd.f32 0.0, %v589
          %v591 = vpop.f32.mrb[0].mxu0
          %592 = vmatprep.mubr.f32.mxu0 0.0
          %593 = vmatmul.mubr.f32.gmra.mrb[0].mxu0 %v468
          %v594 = vpop.f32.mrb[0].mxu0
          %v595 = vadd.f32 0.0, %v594
          %v596 = vpop.f32.mrb[0].mxu0
          %597 = vmatprep.mubr.f32.mxu0 0.0
          %598 = vmatmul.mubr.f32.gmra.mrb[0].mxu0 %v469
          %v599 = vpop.f32.mrb[0].mxu0
          %v600 = vadd.f32 0.0, %v599
          %v601 = vpop.f32.mrb[0].mxu0
          %602 = vmatprep.mubr.f32.mxu0 0.0
          %603 = vmatmul.mubr.f32.gmra.mrb[0].mxu0 %v470
          %v604 = vpop.f32.mrb[0].mxu0
          %v605 = vadd.f32 0.0, %v604
          %v606 = vpop.f32.mrb[0].mxu0
          %607 = vmatprep.mubr.f32.mxu0 0.0
          %608 = vmatmul.mubr.f32.gmra.mrb[0].mxu0 %v471
          %v609 = vpop.f32.mrb[0].mxu0
          %v610 = vadd.f32 0.0, %v609
          %v611 = vpop.f32.mrb[0].mxu0
          %612 = vmatprep.mubr.f32.mxu0 0.0
          %613 = vmatmul.mubr.f32.gmra.mrb[0].mxu0 %v472
          %v614 = vpop.f32.mrb[0].mxu0
          %v615 = vadd.f32 0.0, %v614
          %v616 = vpop.f32.mrb[0].mxu0
          %617 = vmatprep.mubr.f32.mxu0 0.0
          %618 = vmatmul.mubr.f32.gmra.mrb[0].mxu0 %v473
          %v619 = vpop.f32.mrb[0].mxu0
          %v620 = vadd.f32 0.0, %v619
          %v621 = vpop.f32.mrb[0].mxu0
          %622 = vmatprep.mubr.f32.mxu0 0.0
          %623 = vmatmul.mubr.f32.gmra.mrb[0].mxu0 %v474
          %v624 = vpop.f32.mrb[0].mxu0
          %v625 = vadd.f32 0.0, %v624
          %v626 = vpop.f32.mrb[0].mxu0
          %627 = vmatprep.mubr.f32.mxu0 0.0
          %628 = vmatmul.mubr.f32.gmra.mrb[0].mxu0 %v475
          %v629 = vpop.f32.mrb[0].mxu0
          %v630 = vadd.f32 0.0, %v629
          %v631 = vpop.f32.mrb[0].mxu0
          %632 = vmatprep.mubr.f32.mxu0 0.0
          %633 = vmatmul.mubr.f32.gmra.mrb[0].mxu0 %v476
          %v634 = vpop.f32.mrb[0].mxu0
          %v635 = vadd.f32 0.0, %v634
          %v636 = vpop.f32.mrb[0].mxu0
          %637 = vmatprep.mubr.f32.mxu0 0.0
          %638 = vmatmul.mubr.f32.gmra.mrb[0].mxu0 %v477
          %v639 = vpop.f32.mrb[0].mxu0
          %v640 = vadd.f32 0.0, %v639
          %v641 = vpop.f32.mrb[0].mxu0
          %642 = vmatprep.mubr.f32.mxu0 0.0
          %643 = vmatmul.mubr.f32.gmra.mrb[0].mxu0 %v478
          %v644 = vpop.f32.mrb[0].mxu0
          %v645 = vadd.f32 0.0, %v644
          %v646 = vpop.f32.mrb[0].mxu0
          %647 = vmatprep.mubr.f32.mxu0 0.0
          %648 = vmatmul.mubr.f32.gmra.mrb[0].mxu0 %v479
          %v649 = vpop.f32.mrb[0].mxu0
          %v650 = vadd.f32 0.0, %v649
          %v651 = vpop.f32.mrb[0].mxu0
          %652 = vmatprep.mubr.f32.mxu0 0.0
          %653 = vmatmul.mubr.f32.gmra.mrb[0].mxu0 %v480
          %v654 = vpop.f32.mrb[0].mxu0
          %v655 = vadd.f32 0.0, %v654
          %v656 = vpop.f32.mrb[0].mxu0
          %657 = vmatprep.mubr.f32.mxu0 0.0
          %658 = vmatmul.mubr.f32.gmra.mrb[0].mxu0 %v481
          %v659 = vpop.f32.mrb[0].mxu0
          %v660 = vadd.f32 0.0, %v659
          %v661 = vpop.f32.mrb[0].mxu0
          %662 = vmatprep.mubr.f32.mxu0 0.0
          %663 = vmatmul.mubr.f32.gmra.mrb[0].mxu0 %v482
          %v664 = vpop.f32.mrb[0].mxu0
          %v665 = vadd.f32 0.0, %v664
          %v666 = vpop.f32.mrb[0].mxu0
          %667 = vmatprep.mubr.f32.mxu0 0.0
          %668 = vmatmul.mubr.f32.gmra.mrb[0].mxu0 %v483
          %v669 = vpop.f32.mrb[0].mxu0
          %v670 = vadd.f32 0.0, %v669
          %v671 = vpop.f32.mrb[0].mxu0
          %672 = vmatprep.mubr.f32.mxu0 0.0
          %673 = vmatmul.mubr.f32.gmra.mrb[0].mxu0 %v484
          %v674 = vpop.f32.mrb[0].mxu0
          %v675 = vadd.f32 0.0, %v674
          %v676 = vpop.f32.mrb[0].mxu0
          %677 = vmatprep.mubr.f32.mxu0 0.0
          %678 = vmatmul.mubr.f32.gmra.mrb[0].mxu0 %v485
          %v679 = vpop.f32.mrb[0].mxu0
          %v680 = vadd.f32 0.0, %v679
          %v681 = vpop.f32.mrb[0].mxu0
          %682 = vmatprep.mubr.f32.mxu0 0.0
          %683 = vmatmul.mubr.f32.gmra.mrb[0].mxu0 %v486
          %v684 = vpop.f32.mrb[0].mxu0
          %v685 = vadd.f32 0.0, %v684
          %v686 = vpop.f32.mrb[0].mxu0
          %687 = vmatprep.mubr.f32.mxu0 0.0
          %688 = vmatmul.mubr.f32.gmra.mrb[0].mxu0 %v487
          %v689 = vpop.f32.mrb[0].mxu0
          %v690 = vadd.f32 0.0, %v689
          %v691 = vpop.f32.mrb[0].mxu0
          %692 = vmatprep.mubr.f32.mxu0 0.0
          %693 = vmatmul.mubr.f32.gmra.mrb[0].mxu0 %v488
          %v694 = vpop.f32.mrb[0].mxu0
          %v695 = vadd.f32 0.0, %v694
          %v696 = vpop.f32.mrb[0].mxu0
          %697 = vmatprep.mubr.f32.mxu0 0.0
          %698 = vmatmul.mubr.f32.gmra.mrb[0].mxu0 %v489
          %v699 = vpop.f32.mrb[0].mxu0
          %v700 = vadd.f32 0.0, %v699
          %v701 = vpop.f32.mrb[0].mxu0
          %702 = vmatprep.mubr.f32.mxu0 0.0
          %703 = vmatmul.mubr.f32.gmra.mrb[0].mxu0 %v490
          %v704 = vpop.f32.mrb[0].mxu0
          %v705 = vadd.f32 0.0, %v704
          %v706 = vpop.f32.mrb[0].mxu0
          %707 = vmatprep.mubr.f32.mxu0 0.0
          %708 = vmatmul.mubr.f32.gmra.mrb[0].mxu0 %v491
          %v709 = vpop.f32.mrb[0].mxu0
          %v710 = vadd.f32 0.0, %v709
          %v711 = vpop.f32.mrb[0].mxu0
          %712 = vmatprep.mubr.f32.mxu0 0.0
          %713 = vmatmul.mubr.f32.gmra.mrb[0].mxu0 %v492
          %v714 = vpop.f32.mrb[0].mxu0
          %v715 = vadd.f32 0.0, %v714
          %v716 = vpop.f32.mrb[0].mxu0
          %717 = vmatprep.mubr.f32.mxu0 0.0
          %718 = vmatmul.mubr.f32.gmra.mrb[0].mxu0 %v493
          %v719 = vpop.f32.mrb[0].mxu0
          %v720 = vadd.f32 0.0, %v719
          %v721 = vpop.f32.mrb[0].mxu0
          %722 = vmatprep.mubr.f32.mxu0 0.0
          %723 = vmatmul.mubr.f32.gmra.mrb[0].mxu0 %v494
          %v724 = vpop.f32.mrb[0].mxu0
          %v725 = vadd.f32 0.0, %v724
          %v726 = vpop.f32.mrb[0].mxu0
          %727 = vmatprep.mubr.f32.mxu0 0.0
          %728 = vmatmul.mubr.f32.gmra.mrb[0].mxu0 %v495
          %v729 = vpop.f32.mrb[0].mxu0
          %v730 = vadd.f32 0.0, %v729
          %v731 = vpop.f32.mrb[0].mxu0
          %732 = vmatprep.mubr.f32.mxu0 0.0
          %733 = vmatmul.mubr.f32.gmra.mrb[0].mxu0 %v496
          %v734 = vpop.f32.mrb[0].mxu0
          %v735 = vadd.f32 0.0, %v734
          %v736 = vpop.f32.mrb[0].mxu0
          %737 = vdwg.mxu0
          %v738 = vpack.c.bf16 %v585, %v580
          %v739 = vpack.c.bf16 %v595, %v590
          %v740 = vpack.c.bf16 %v605, %v600
          %v741 = vpack.c.bf16 %v615, %v610
          %v742 = vpack.c.bf16 %v625, %v620
          %v743 = vpack.c.bf16 %v635, %v630
          %v744 = vpack.c.bf16 %v645, %v640
          %v745 = vpack.c.bf16 %v655, %v650
          %v746 = vpack.c.bf16 %v665, %v660
          %v747 = vpack.c.bf16 %v675, %v670
          %v748 = vpack.c.bf16 %v685, %v680
          %v749 = vpack.c.bf16 %v695, %v690
          %v750 = vpack.c.bf16 %v705, %v700
          %v751 = vpack.c.bf16 %v715, %v710
          %v752 = vpack.c.bf16 %v725, %v720
          %v753 = vpack.c.bf16 %v735, %v730
          %754 = vst [vmem:[#allocation3] sm:$0xff] %v738
          %755 = vst [vmem:[#allocation3 + $0x8] sm:$0xff] %v739
          %756 = vst [vmem:[#allocation3 + $0x10] sm:$0xff] %v740
          %757 = vst [vmem:[#allocation3 + $0x18] sm:$0xff] %v741
          %758 = vst [vmem:[#allocation3 + $0x20] sm:$0xff] %v742
          %759 = vst [vmem:[#allocation3 + $0x28] sm:$0xff] %v743
          %760 = vst [vmem:[#allocation3 + $0x30] sm:$0xff] %v744
          %761 = vst [vmem:[#allocation3 + $0x38] sm:$0xff] %v745
          %762 = vst [vmem:[#allocation3 + $0x40] sm:$0xff] %v746
          %763 = vst [vmem:[#allocation3 + $0x48] sm:$0xff] %v747
          %764 = vst [vmem:[#allocation3 + $0x50] sm:$0xff] %v748
          %765 = vst [vmem:[#allocation3 + $0x58] sm:$0xff] %v749
          %766 = vst [vmem:[#allocation3 + $0x60] sm:$0xff] %v750
          %767 = vst [vmem:[#allocation3 + $0x68] sm:$0xff] %v751
          %768 = vst [vmem:[#allocation3 + $0x70] sm:$0xff] %v752
          %769 = vst [vmem:[#allocation3 + $0x78] sm:$0xff] %v753
        $region76: #{tpu_custom_call.1} parent=47 // pred_fallthru
          _
        // Predicated region
        $region77: #{tpu_custom_call.1} parent=47 // pred_check
          %p770 = pneg %p392
        $region78: #{tpu_custom_call.1} parent=47 // pred_check_branch
          %772 = sbr.rel (%p770) target = $region80
        $region79: #{tpu_custom_call.1} parent=47 // pred_region
          %773 = vst [vmem:[#allocation4] sm:$0xff] 0.0
          %774 = vst [vmem:[#allocation4 + $0x8] sm:$0xff] 0.0
          %775 = vst [vmem:[#allocation4 + $0x10] sm:$0xff] 0.0
          %776 = vst [vmem:[#allocation4 + $0x18] sm:$0xff] 0.0
          %777 = vst [vmem:[#allocation4 + $0x20] sm:$0xff] 0.0
          %778 = vst [vmem:[#allocation4 + $0x28] sm:$0xff] 0.0
          %779 = vst [vmem:[#allocation4 + $0x30] sm:$0xff] 0.0
          %780 = vst [vmem:[#allocation4 + $0x38] sm:$0xff] 0.0
          %781 = vst [vmem:[#allocation4 + $0x40] sm:$0xff] 0.0
          %782 = vst [vmem:[#allocation4 + $0x48] sm:$0xff] 0.0
          %783 = vst [vmem:[#allocation4 + $0x50] sm:$0xff] 0.0
          %784 = vst [vmem:[#allocation4 + $0x58] sm:$0xff] 0.0
          %785 = vst [vmem:[#allocation4 + $0x60] sm:$0xff] 0.0
          %786 = vst [vmem:[#allocation4 + $0x68] sm:$0xff] 0.0
          %787 = vst [vmem:[#allocation4 + $0x70] sm:$0xff] 0.0
          %788 = vst [vmem:[#allocation4 + $0x78] sm:$0xff] 0.0
          %789 = vst [vmem:[#allocation4 + $0x80] sm:$0xff] 0.0
          %790 = vst [vmem:[#allocation4 + $0x88] sm:$0xff] 0.0
          %791 = vst [vmem:[#allocation4 + $0x90] sm:$0xff] 0.0
          %792 = vst [vmem:[#allocation4 + $0x98] sm:$0xff] 0.0
          %793 = vst [vmem:[#allocation4 + $0xa0] sm:$0xff] 0.0
          %794 = vst [vmem:[#allocation4 + $0xa8] sm:$0xff] 0.0
          %795 = vst [vmem:[#allocation4 + $0xb0] sm:$0xff] 0.0
          %796 = vst [vmem:[#allocation4 + $0xb8] sm:$0xff] 0.0
          %797 = vst [vmem:[#allocation4 + $0xc0] sm:$0xff] 0.0
          %798 = vst [vmem:[#allocation4 + $0xc8] sm:$0xff] 0.0
          %799 = vst [vmem:[#allocation4 + $0xd0] sm:$0xff] 0.0
          %800 = vst [vmem:[#allocation4 + $0xd8] sm:$0xff] 0.0
          %801 = vst [vmem:[#allocation4 + $0xe0] sm:$0xff] 0.0
          %802 = vst [vmem:[#allocation4 + $0xe8] sm:$0xff] 0.0
          %803 = vst [vmem:[#allocation4 + $0xf0] sm:$0xff] 0.0
          %804 = vst [vmem:[#allocation4 + $0xf8] sm:$0xff] 0.0
        $region80: #{tpu_custom_call.1} parent=47 // pred_fallthru
          _
        %s805 = smul.u32 %s29, 256
        %v806 = vld [vmem:[#allocation4] sm:$0xff]
        %v807 = vld [vmem:[#allocation4 + $0x8] sm:$0xff]
        %v808 = vld [vmem:[#allocation4 + $0x10] sm:$0xff]
        %v809 = vld [vmem:[#allocation4 + $0x18] sm:$0xff]
        %v810 = vld [vmem:[#allocation4 + $0x20] sm:$0xff]
        %v811 = vld [vmem:[#allocation4 + $0x28] sm:$0xff]
        %v812 = vld [vmem:[#allocation4 + $0x30] sm:$0xff]
        %v813 = vld [vmem:[#allocation4 + $0x38] sm:$0xff]
        %v814 = vld [vmem:[#allocation4 + $0x40] sm:$0xff]
        %v815 = vld [vmem:[#allocation4 + $0x48] sm:$0xff]
        %v816 = vld [vmem:[#allocation4 + $0x50] sm:$0xff]
        %v817 = vld [vmem:[#allocation4 + $0x58] sm:$0xff]
        %v818 = vld [vmem:[#allocation4 + $0x60] sm:$0xff]
        %v819 = vld [vmem:[#allocation4 + $0x68] sm:$0xff]
        %v820 = vld [vmem:[#allocation4 + $0x70] sm:$0xff]
        %v821 = vld [vmem:[#allocation4 + $0x78] sm:$0xff]
        %v822 = vld [vmem:[#allocation4 + $0x80] sm:$0xff]
        %v823 = vld [vmem:[#allocation4 + $0x88] sm:$0xff]
        %v824 = vld [vmem:[#allocation4 + $0x90] sm:$0xff]
        %v825 = vld [vmem:[#allocation4 + $0x98] sm:$0xff]
        %v826 = vld [vmem:[#allocation4 + $0xa0] sm:$0xff]
        %v827 = vld [vmem:[#allocation4 + $0xa8] sm:$0xff]
        %v828 = vld [vmem:[#allocation4 + $0xb0] sm:$0xff]
        %v829 = vld [vmem:[#allocation4 + $0xb8] sm:$0xff]
        %v830 = vld [vmem:[#allocation4 + $0xc0] sm:$0xff]
        %v831 = vld [vmem:[#allocation4 + $0xc8] sm:$0xff]
        %v832 = vld [vmem:[#allocation4 + $0xd0] sm:$0xff]
        %v833 = vld [vmem:[#allocation4 + $0xd8] sm:$0xff]
        %v834 = vld [vmem:[#allocation4 + $0xe0] sm:$0xff]
        %v835 = vld [vmem:[#allocation4 + $0xe8] sm:$0xff]
        %v836 = vld [vmem:[#allocation4 + $0xf0] sm:$0xff]
        %v837 = vld [vmem:[#allocation4 + $0xf8] sm:$0xff]
        %v838 = vld [vmem:[#allocation5] sm:$0xff]
        %v839 = vld [vmem:[#allocation5 + $0x8] sm:$0xff]
        %v840 = vld [vmem:[#allocation5 + $0x10] sm:$0xff]
        %v841 = vld [vmem:[#allocation5 + $0x18] sm:$0xff]
        %v842 = vld [vmem:[#allocation5 + $0x20] sm:$0xff]
        %v843 = vld [vmem:[#allocation5 + $0x28] sm:$0xff]
        %v844 = vld [vmem:[#allocation5 + $0x30] sm:$0xff]
        %v845 = vld [vmem:[#allocation5 + $0x38] sm:$0xff]
        %v846 = vld [vmem:[#allocation5 + $0x40] sm:$0xff]
        %v847 = vld [vmem:[#allocation5 + $0x48] sm:$0xff]
        %v848 = vld [vmem:[#allocation5 + $0x50] sm:$0xff]
        %v849 = vld [vmem:[#allocation5 + $0x58] sm:$0xff]
        %v850 = vld [vmem:[#allocation5 + $0x60] sm:$0xff]
        %v851 = vld [vmem:[#allocation5 + $0x68] sm:$0xff]
        %v852 = vld [vmem:[#allocation5 + $0x70] sm:$0xff]
        %v853 = vld [vmem:[#allocation5 + $0x78] sm:$0xff]
        %v854 = vld [vmem:[#allocation5 + $0x80] sm:$0xff]
        %v855 = vld [vmem:[#allocation5 + $0x88] sm:$0xff]
        %v856 = vld [vmem:[#allocation5 + $0x90] sm:$0xff]
        %v857 = vld [vmem:[#allocation5 + $0x98] sm:$0xff]
        %v858 = vld [vmem:[#allocation5 + $0xa0] sm:$0xff]
        %v859 = vld [vmem:[#allocation5 + $0xa8] sm:$0xff]
        %v860 = vld [vmem:[#allocation5 + $0xb0] sm:$0xff]
        %v861 = vld [vmem:[#allocation5 + $0xb8] sm:$0xff]
        %v862 = vld [vmem:[#allocation5 + $0xc0] sm:$0xff]
        %v863 = vld [vmem:[#allocation5 + $0xc8] sm:$0xff]
        %v864 = vld [vmem:[#allocation5 + $0xd0] sm:$0xff]
        %v865 = vld [vmem:[#allocation5 + $0xd8] sm:$0xff]
        %v866 = vld [vmem:[#allocation5 + $0xe0] sm:$0xff]
        %v867 = vld [vmem:[#allocation5 + $0xe8] sm:$0xff]
        %v868 = vld [vmem:[#allocation5 + $0xf0] sm:$0xff]
        %v869 = vld [vmem:[#allocation5 + $0xf8] sm:$0xff]
        %s870 = sshra.s32 %s805, 4
        %s871 = sand.u32 %s805, 15
        %s872 = smul.addr %s870, 8
        %s873 = scalar_lea.vmem [#allocation3], %s872
        %v874 = vld [vmem:[%s873] sm:$0xff]
        %v875 = vld [vmem:[%s873 + $0x8] sm:$0xff]
        %v876 = vld [vmem:[%s873 + $0x10] sm:$0xff]
        %v877 = vld [vmem:[%s873 + $0x18] sm:$0xff]
        %v878 = vld [vmem:[%s873 + $0x20] sm:$0xff]
        %v879 = vld [vmem:[%s873 + $0x28] sm:$0xff]
        %v880 = vld [vmem:[%s873 + $0x30] sm:$0xff]
        %v881 = vld [vmem:[%s873 + $0x38] sm:$0xff]
        %v882 = vld [vmem:[%s873 + $0x40] sm:$0xff]
        %v883 = vld [vmem:[%s873 + $0x48] sm:$0xff]
        %v884 = vld [vmem:[%s873 + $0x50] sm:$0xff]
        %v885 = vld [vmem:[%s873 + $0x58] sm:$0xff]
        %v886 = vld [vmem:[%s873 + $0x60] sm:$0xff]
        %v887 = vld [vmem:[%s873 + $0x68] sm:$0xff]
        %v888 = vld [vmem:[%s873 + $0x70] sm:$0xff]
        %v889 = vld [vmem:[%s873 + $0x78] sm:$0xff]
        %v922 = vunpack.c.l.b16 %v838
        %v923 = vunpack.c.h.b16 %v838
        %v924 = vunpack.c.l.b16 %v839
        %v925 = vunpack.c.h.b16 %v839
        %v926 = vunpack.c.l.b16 %v840
        %v927 = vunpack.c.h.b16 %v840
        %v928 = vunpack.c.l.b16 %v841
        %v929 = vunpack.c.h.b16 %v841
        %v930 = vunpack.c.l.b16 %v842
        %v931 = vunpack.c.h.b16 %v842
        %v932 = vunpack.c.l.b16 %v843
        %v933 = vunpack.c.h.b16 %v843
        %v934 = vunpack.c.l.b16 %v844
        %v935 = vunpack.c.h.b16 %v844
        %v936 = vunpack.c.l.b16 %v845
        %v937 = vunpack.c.h.b16 %v845
        %v938 = vunpack.c.l.b16 %v846
        %v939 = vunpack.c.h.b16 %v846
        %v940 = vunpack.c.l.b16 %v847
        %v941 = vunpack.c.h.b16 %v847
        %v942 = vunpack.c.l.b16 %v848
        %v943 = vunpack.c.h.b16 %v848
        %v944 = vunpack.c.l.b16 %v849
        %v945 = vunpack.c.h.b16 %v849
        %v946 = vunpack.c.l.b16 %v850
        %v947 = vunpack.c.h.b16 %v850
        %v948 = vunpack.c.l.b16 %v851
        %v949 = vunpack.c.h.b16 %v851
        %v950 = vunpack.c.l.b16 %v852
        %v951 = vunpack.c.h.b16 %v852
        %v952 = vunpack.c.l.b16 %v853
        %v953 = vunpack.c.h.b16 %v853
        %v954 = vunpack.c.l.b16 %v854
        %v955 = vunpack.c.h.b16 %v854
        %v956 = vunpack.c.l.b16 %v855
        %v957 = vunpack.c.h.b16 %v855
        %v958 = vunpack.c.l.b16 %v856
        %v959 = vunpack.c.h.b16 %v856
        %v960 = vunpack.c.l.b16 %v857
        %v961 = vunpack.c.h.b16 %v857
        %v962 = vunpack.c.l.b16 %v858
        %v963 = vunpack.c.h.b16 %v858
        %v964 = vunpack.c.l.b16 %v859
        %v965 = vunpack.c.h.b16 %v859
        %v966 = vunpack.c.l.b16 %v860
        %v967 = vunpack.c.h.b16 %v860
        %v968 = vunpack.c.l.b16 %v861
        %v969 = vunpack.c.h.b16 %v861
        %v970 = vunpack.c.l.b16 %v862
        %v971 = vunpack.c.h.b16 %v862
        %v972 = vunpack.c.l.b16 %v863
        %v973 = vunpack.c.h.b16 %v863
        %v974 = vunpack.c.l.b16 %v864
        %v975 = vunpack.c.h.b16 %v864
        %v976 = vunpack.c.l.b16 %v865
        %v977 = vunpack.c.h.b16 %v865
        %v978 = vunpack.c.l.b16 %v866
        %v979 = vunpack.c.h.b16 %v866
        %v980 = vunpack.c.l.b16 %v867
        %v981 = vunpack.c.h.b16 %v867
        %v982 = vunpack.c.l.b16 %v868
        %v983 = vunpack.c.h.b16 %v868
        %v984 = vunpack.c.l.b16 %v869
        %v985 = vunpack.c.h.b16 %v869
        %v986 = vpack.c.b16 %v924, %v922
        %v987 = vpack.c.b16 %v925, %v923
        %v988 = vpack.c.b16 %v928, %v926
        %v989 = vpack.c.b16 %v929, %v927
        %v990 = vpack.c.b16 %v932, %v930
        %v991 = vpack.c.b16 %v933, %v931
        %v992 = vpack.c.b16 %v936, %v934
        %v993 = vpack.c.b16 %v937, %v935
        %v994 = vpack.c.b16 %v940, %v938
        %v995 = vpack.c.b16 %v941, %v939
        %v996 = vpack.c.b16 %v944, %v942
        %v997 = vpack.c.b16 %v945, %v943
        %v998 = vpack.c.b16 %v948, %v946
        %v999 = vpack.c.b16 %v949, %v947
        %v1000 = vpack.c.b16 %v952, %v950
        %v1001 = vpack.c.b16 %v953, %v951
        %v1002 = vpack.c.b16 %v956, %v954
        %v1003 = vpack.c.b16 %v957, %v955
        %v1004 = vpack.c.b16 %v960, %v958
        %v1005 = vpack.c.b16 %v961, %v959
        %v1006 = vpack.c.b16 %v964, %v962
        %v1007 = vpack.c.b16 %v965, %v963
        %v1008 = vpack.c.b16 %v968, %v966
        %v1009 = vpack.c.b16 %v969, %v967
        %v1010 = vpack.c.b16 %v972, %v970
        %v1011 = vpack.c.b16 %v973, %v971
        %v1012 = vpack.c.b16 %v976, %v974
        %v1013 = vpack.c.b16 %v977, %v975
        %v1014 = vpack.c.b16 %v980, %v978
        %v1015 = vpack.c.b16 %v981, %v979
        %v1016 = vpack.c.b16 %v984, %v982
        %v1017 = vpack.c.b16 %v985, %v983
        %1050 = vmatprep.subr.bf16.mxu0 0
        %1051 = vmatpush1.bf16.msra.mxu0 %v874
        %1052 = vmatprep.subr.bf16.mxu0 0
        %1053 = vmatpush1.bf16.msra.mxu0 %v875
        %1054 = vmatprep.subr.bf16.mxu0 0
        %1055 = vmatpush1.bf16.msra.mxu0 %v876
        %1056 = vmatprep.subr.bf16.mxu0 0
        %1057 = vmatpush1.bf16.msra.mxu0 %v877
        %1058 = vmatprep.subr.bf16.mxu0 0
        %1059 = vmatpush1.bf16.msra.mxu0 %v878
        %1060 = vmatprep.subr.bf16.mxu0 0
        %1061 = vmatpush1.bf16.msra.mxu0 %v879
        %1062 = vmatprep.subr.bf16.mxu0 0
        %1063 = vmatpush1.bf16.msra.mxu0 %v880
        %1064 = vmatprep.subr.bf16.mxu0 0
        %1065 = vmatpush1.bf16.msra.mxu0 %v881
        %1066 = vmatprep.subr.bf16.mxu0 0
        %1067 = vmatpush1.bf16.msra.mxu0 %v882
        %1068 = vmatprep.subr.bf16.mxu0 0
        %1069 = vmatpush1.bf16.msra.mxu0 %v883
        %1070 = vmatprep.subr.bf16.mxu0 0
        %1071 = vmatpush1.bf16.msra.mxu0 %v884
        %1072 = vmatprep.subr.bf16.mxu0 0
        %1073 = vmatpush1.bf16.msra.mxu0 %v885
        %1074 = vmatprep.subr.bf16.mxu0 0
        %1075 = vmatpush1.bf16.msra.mxu0 %v886
        %1076 = vmatprep.subr.bf16.mxu0 0
        %1077 = vmatpush1.bf16.msra.mxu0 %v887
        %1078 = vmatprep.subr.bf16.mxu0 0
        %1079 = vmatpush1.bf16.msra.mxu0 %v888
        %1080 = vmatprep.subr.bf16.mxu0 0
        %1081 = vmatpush1.bf16.msra.mxu0 %v889
        %1082 = vmatprep.mubr.bf16.mxu0 %v987
        %1083 = vmatmul.mubr.bf16.gmra.mrb[0].mxu0 %v986
        %v1084 = vpop.f32.mrb[0].mxu0
        %v1085 = vadd.f32 0.0, %v1084
        %v1086 = vpop.f32.mrb[0].mxu0
        %v1087 = vpop.f32.mrb[0].mxu0
        %v1088 = vadd.f32 0.0, %v1087
        %v1089 = vpop.f32.mrb[0].mxu0
        %1090 = vmatprep.mubr.bf16.mxu0 %v989
        %1091 = vmatmul.mubr.bf16.gmra.mrb[0].mxu0 %v988
        %v1092 = vpop.f32.mrb[0].mxu0
        %v1093 = vadd.f32 0.0, %v1092
        %v1094 = vpop.f32.mrb[0].mxu0
        %v1095 = vpop.f32.mrb[0].mxu0
        %v1096 = vadd.f32 0.0, %v1095
        %v1097 = vpop.f32.mrb[0].mxu0
        %1098 = vmatprep.mubr.bf16.mxu0 %v991
        %1099 = vmatmul.mubr.bf16.gmra.mrb[0].mxu0 %v990
        %v1100 = vpop.f32.mrb[0].mxu0
        %v1101 = vadd.f32 0.0, %v1100
        %v1102 = vpop.f32.mrb[0].mxu0
        %v1103 = vpop.f32.mrb[0].mxu0
        %v1104 = vadd.f32 0.0, %v1103
        %v1105 = vpop.f32.mrb[0].mxu0
        %1106 = vmatprep.mubr.bf16.mxu0 %v993
        %1107 = vmatmul.mubr.bf16.gmra.mrb[0].mxu0 %v992
        %v1108 = vpop.f32.mrb[0].mxu0
        %v1109 = vadd.f32 0.0, %v1108
        %v1110 = vpop.f32.mrb[0].mxu0
        %v1111 = vpop.f32.mrb[0].mxu0
        %v1112 = vadd.f32 0.0, %v1111
        %v1113 = vpop.f32.mrb[0].mxu0
        %1114 = vmatprep.mubr.bf16.mxu0 %v995
        %1115 = vmatmul.mubr.bf16.gmra.mrb[0].mxu0 %v994
        %v1116 = vpop.f32.mrb[0].mxu0
        %v1117 = vadd.f32 0.0, %v1116
        %v1118 = vpop.f32.mrb[0].mxu0
        %v1119 = vpop.f32.mrb[0].mxu0
        %v1120 = vadd.f32 0.0, %v1119
        %v1121 = vpop.f32.mrb[0].mxu0
        %1122 = vmatprep.mubr.bf16.mxu0 %v997
        %1123 = vmatmul.mubr.bf16.gmra.mrb[0].mxu0 %v996
        %v1124 = vpop.f32.mrb[0].mxu0
        %v1125 = vadd.f32 0.0, %v1124
        %v1126 = vpop.f32.mrb[0].mxu0
        %v1127 = vpop.f32.mrb[0].mxu0
        %v1128 = vadd.f32 0.0, %v1127
        %v1129 = vpop.f32.mrb[0].mxu0
        %1130 = vmatprep.mubr.bf16.mxu0 %v999
        %1131 = vmatmul.mubr.bf16.gmra.mrb[0].mxu0 %v998
        %v1132 = vpop.f32.mrb[0].mxu0
        %v1133 = vadd.f32 0.0, %v1132
        %v1134 = vpop.f32.mrb[0].mxu0
        %v1135 = vpop.f32.mrb[0].mxu0
        %v1136 = vadd.f32 0.0, %v1135
        %v1137 = vpop.f32.mrb[0].mxu0
        %1138 = vmatprep.mubr.bf16.mxu0 %v1001
        %1139 = vmatmul.mubr.bf16.gmra.mrb[0].mxu0 %v1000
        %v1140 = vpop.f32.mrb[0].mxu0
        %v1141 = vadd.f32 0.0, %v1140
        %v1142 = vpop.f32.mrb[0].mxu0
        %v1143 = vpop.f32.mrb[0].mxu0
        %v1144 = vadd.f32 0.0, %v1143
        %v1145 = vpop.f32.mrb[0].mxu0
        %1146 = vmatprep.mubr.bf16.mxu0 %v1003
        %1147 = vmatmul.mubr.bf16.gmra.mrb[0].mxu0 %v1002
        %v1148 = vpop.f32.mrb[0].mxu0
        %v1149 = vadd.f32 0.0, %v1148
        %v1150 = vpop.f32.mrb[0].mxu0
        %v1151 = vpop.f32.mrb[0].mxu0
        %v1152 = vadd.f32 0.0, %v1151
        %v1153 = vpop.f32.mrb[0].mxu0
        %1154 = vmatprep.mubr.bf16.mxu0 %v1005
        %1155 = vmatmul.mubr.bf16.gmra.mrb[0].mxu0 %v1004
        %v1156 = vpop.f32.mrb[0].mxu0
        %v1157 = vadd.f32 0.0, %v1156
        %v1158 = vpop.f32.mrb[0].mxu0
        %v1159 = vpop.f32.mrb[0].mxu0
        %v1160 = vadd.f32 0.0, %v1159
        %v1161 = vpop.f32.mrb[0].mxu0
        %1162 = vmatprep.mubr.bf16.mxu0 %v1007
        %1163 = vmatmul.mubr.bf16.gmra.mrb[0].mxu0 %v1006
        %v1164 = vpop.f32.mrb[0].mxu0
        %v1165 = vadd.f32 0.0, %v1164
        %v1166 = vpop.f32.mrb[0].mxu0
        %v1167 = vpop.f32.mrb[0].mxu0
        %v1168 = vadd.f32 0.0, %v1167
        %v1169 = vpop.f32.mrb[0].mxu0
        %1170 = vmatprep.mubr.bf16.mxu0 %v1009
        %1171 = vmatmul.mubr.bf16.gmra.mrb[0].mxu0 %v1008
        %v1172 = vpop.f32.mrb[0].mxu0
        %v1173 = vadd.f32 0.0, %v1172
        %v1174 = vpop.f32.mrb[0].mxu0
        %v1175 = vpop.f32.mrb[0].mxu0
        %v1176 = vadd.f32 0.0, %v1175
        %v1177 = vpop.f32.mrb[0].mxu0
        %1178 = vmatprep.mubr.bf16.mxu0 %v1011
        %1179 = vmatmul.mubr.bf16.gmra.mrb[0].mxu0 %v1010
        %v1180 = vpop.f32.mrb[0].mxu0
        %v1181 = vadd.f32 0.0, %v1180
        %v1182 = vpop.f32.mrb[0].mxu0
        %v1183 = vpop.f32.mrb[0].mxu0
        %v1184 = vadd.f32 0.0, %v1183
        %v1185 = vpop.f32.mrb[0].mxu0
        %1186 = vmatprep.mubr.bf16.mxu0 %v1013
        %1187 = vmatmul.mubr.bf16.gmra.mrb[0].mxu0 %v1012
        %v1188 = vpop.f32.mrb[0].mxu0
        %v1189 = vadd.f32 0.0, %v1188
        %v1190 = vpop.f32.mrb[0].mxu0
        %v1191 = vpop.f32.mrb[0].mxu0
        %v1192 = vadd.f32 0.0, %v1191
        %v1193 = vpop.f32.mrb[0].mxu0
        %1194 = vmatprep.mubr.bf16.mxu0 %v1015
        %1195 = vmatmul.mubr.bf16.gmra.mrb[0].mxu0 %v1014
        %v1196 = vpop.f32.mrb[0].mxu0
        %v1197 = vadd.f32 0.0, %v1196
        %v1198 = vpop.f32.mrb[0].mxu0
        %v1199 = vpop.f32.mrb[0].mxu0
        %v1200 = vadd.f32 0.0, %v1199
        %v1201 = vpop.f32.mrb[0].mxu0
        %1202 = vmatprep.mubr.bf16.mxu0 %v1017
        %1203 = vmatmul.mubr.bf16.gmra.mrb[0].mxu0 %v1016
        %v1204 = vpop.f32.mrb[0].mxu0
        %v1205 = vadd.f32 0.0, %v1204
        %v1206 = vpop.f32.mrb[0].mxu0
        %v1207 = vpop.f32.mrb[0].mxu0
        %v1208 = vadd.f32 0.0, %v1207
        %v1209 = vpop.f32.mrb[0].mxu0
        %1210 = vdwg.mxu0
        %v1211 = vadd.f32 %v806, %v1085
        %v1212 = vadd.f32 %v807, %v1088
        %v1213 = vadd.f32 %v808, %v1093
        %v1214 = vadd.f32 %v809, %v1096
        %v1215 = vadd.f32 %v810, %v1101
        %v1216 = vadd.f32 %v811, %v1104
        %v1217 = vadd.f32 %v812, %v1109
        %v1218 = vadd.f32 %v813, %v1112
        %v1219 = vadd.f32 %v814, %v1117
        %v1220 = vadd.f32 %v815, %v1120
        %v1221 = vadd.f32 %v816, %v1125
        %v1222 = vadd.f32 %v817, %v1128
        %v1223 = vadd.f32 %v818, %v1133
        %v1224 = vadd.f32 %v819, %v1136
        %v1225 = vadd.f32 %v820, %v1141
        %v1226 = vadd.f32 %v821, %v1144
        %v1227 = vadd.f32 %v822, %v1149
        %v1228 = vadd.f32 %v823, %v1152
        %v1229 = vadd.f32 %v824, %v1157
        %v1230 = vadd.f32 %v825, %v1160
        %v1231 = vadd.f32 %v826, %v1165
        %v1232 = vadd.f32 %v827, %v1168
        %v1233 = vadd.f32 %v828, %v1173
        %v1234 = vadd.f32 %v829, %v1176
        %v1235 = vadd.f32 %v830, %v1181
        %v1236 = vadd.f32 %v831, %v1184
        %v1237 = vadd.f32 %v832, %v1189
        %v1238 = vadd.f32 %v833, %v1192
        %v1239 = vadd.f32 %v834, %v1197
        %v1240 = vadd.f32 %v835, %v1200
        %v1241 = vadd.f32 %v836, %v1205
        %v1242 = vadd.f32 %v837, %v1208
        %1243 = vst [vmem:[#allocation4] sm:$0xff] %v1211
        %1244 = vst [vmem:[#allocation4 + $0x8] sm:$0xff] %v1212
        %1245 = vst [vmem:[#allocation4 + $0x10] sm:$0xff] %v1213
        %1246 = vst [vmem:[#allocation4 + $0x18] sm:$0xff] %v1214
        %1247 = vst [vmem:[#allocation4 + $0x20] sm:$0xff] %v1215
        %1248 = vst [vmem:[#allocation4 + $0x28] sm:$0xff] %v1216
        %1249 = vst [vmem:[#allocation4 + $0x30] sm:$0xff] %v1217
        %1250 = vst [vmem:[#allocation4 + $0x38] sm:$0xff] %v1218
        %1251 = vst [vmem:[#allocation4 + $0x40] sm:$0xff] %v1219
        %1252 = vst [vmem:[#allocation4 + $0x48] sm:$0xff] %v1220
        %1253 = vst [vmem:[#allocation4 + $0x50] sm:$0xff] %v1221
        %1254 = vst [vmem:[#allocation4 + $0x58] sm:$0xff] %v1222
        %1255 = vst [vmem:[#allocation4 + $0x60] sm:$0xff] %v1223
        %1256 = vst [vmem:[#allocation4 + $0x68] sm:$0xff] %v1224
        %1257 = vst [vmem:[#allocation4 + $0x70] sm:$0xff] %v1225
        %1258 = vst [vmem:[#allocation4 + $0x78] sm:$0xff] %v1226
        %1259 = vst [vmem:[#allocation4 + $0x80] sm:$0xff] %v1227
        %1260 = vst [vmem:[#allocation4 + $0x88] sm:$0xff] %v1228
        %1261 = vst [vmem:[#allocation4 + $0x90] sm:$0xff] %v1229
        %1262 = vst [vmem:[#allocation4 + $0x98] sm:$0xff] %v1230
        %1263 = vst [vmem:[#allocation4 + $0xa0] sm:$0xff] %v1231
        %1264 = vst [vmem:[#allocation4 + $0xa8] sm:$0xff] %v1232
        %1265 = vst [vmem:[#allocation4 + $0xb0] sm:$0xff] %v1233
        %1266 = vst [vmem:[#allocation4 + $0xb8] sm:$0xff] %v1234
        %1267 = vst [vmem:[#allocation4 + $0xc0] sm:$0xff] %v1235
        %1268 = vst [vmem:[#allocation4 + $0xc8] sm:$0xff] %v1236
        %1269 = vst [vmem:[#allocation4 + $0xd0] sm:$0xff] %v1237
        %1270 = vst [vmem:[#allocation4 + $0xd8] sm:$0xff] %v1238
        %1271 = vst [vmem:[#allocation4 + $0xe0] sm:$0xff] %v1239
        %1272 = vst [vmem:[#allocation4 + $0xe8] sm:$0xff] %v1240
        %1273 = vst [vmem:[#allocation4 + $0xf0] sm:$0xff] %v1241
        %1274 = vst [vmem:[#allocation4 + $0xf8] sm:$0xff] %v1242
        // Predicated region
        $region81: #{tpu_custom_call.1} parent=47 // pred_check
          %p1275 = pneg %p392
        $region82: #{tpu_custom_call.1} parent=47 // pred_check_branch
          %1277 = sbr.rel (%p1275) target = $region84
        $region83: #{tpu_custom_call.1} parent=47 // pred_region
          %v1278 = vld [vmem:[#allocation4] sm:$0xff]
          %v1279 = vld [vmem:[#allocation4 + $0x8] sm:$0xff]
          %v1280 = vld [vmem:[#allocation4 + $0x10] sm:$0xff]
          %v1281 = vld [vmem:[#allocation4 + $0x18] sm:$0xff]
          %v1282 = vld [vmem:[#allocation4 + $0x20] sm:$0xff]
          %v1283 = vld [vmem:[#allocation4 + $0x28] sm:$0xff]
          %v1284 = vld [vmem:[#allocation4 + $0x30] sm:$0xff]
          %v1285 = vld [vmem:[#allocation4 + $0x38] sm:$0xff]
          %v1286 = vld [vmem:[#allocation4 + $0x40] sm:$0xff]
          %v1287 = vld [vmem:[#allocation4 + $0x48] sm:$0xff]
          %v1288 = vld [vmem:[#allocation4 + $0x50] sm:$0xff]
          %v1289 = vld [vmem:[#allocation4 + $0x58] sm:$0xff]
          %v1290 = vld [vmem:[#allocation4 + $0x60] sm:$0xff]
          %v1291 = vld [vmem:[#allocation4 + $0x68] sm:$0xff]
          %v1292 = vld [vmem:[#allocation4 + $0x70] sm:$0xff]
          %v1293 = vld [vmem:[#allocation4 + $0x78] sm:$0xff]
          %v1294 = vld [vmem:[#allocation4 + $0x80] sm:$0xff]
          %v1295 = vld [vmem:[#allocation4 + $0x88] sm:$0xff]
          %v1296 = vld [vmem:[#allocation4 + $0x90] sm:$0xff]
          %v1297 = vld [vmem:[#allocation4 + $0x98] sm:$0xff]
          %v1298 = vld [vmem:[#allocation4 + $0xa0] sm:$0xff]
          %v1299 = vld [vmem:[#allocation4 + $0xa8] sm:$0xff]
          %v1300 = vld [vmem:[#allocation4 + $0xb0] sm:$0xff]
          %v1301 = vld [vmem:[#allocation4 + $0xb8] sm:$0xff]
          %v1302 = vld [vmem:[#allocation4 + $0xc0] sm:$0xff]
          %v1303 = vld [vmem:[#allocation4 + $0xc8] sm:$0xff]
          %v1304 = vld [vmem:[#allocation4 + $0xd0] sm:$0xff]
          %v1305 = vld [vmem:[#allocation4 + $0xd8] sm:$0xff]
          %v1306 = vld [vmem:[#allocation4 + $0xe0] sm:$0xff]
          %v1307 = vld [vmem:[#allocation4 + $0xe8] sm:$0xff]
          %v1308 = vld [vmem:[#allocation4 + $0xf0] sm:$0xff]
          %v1309 = vld [vmem:[#allocation4 + $0xf8] sm:$0xff]
          %v1310 = vld [vmem:[%s386] sm:$0x1]
          %v1312 = vlaneseq
          %v1313 = vshrl.u32 %v1312, 7
          %v1314 = vsub.s32 0, %v1313
          %v1315 = vrot.slane %v1310, %v1314
          %v1317 = vadd.f32 %v1278, %v1315
          %v1318 = vadd.f32 %v1279, %v1315
          %v1319 = vadd.f32 %v1280, %v1315
          %v1320 = vadd.f32 %v1281, %v1315
          %v1321 = vadd.f32 %v1282, %v1315
          %v1322 = vadd.f32 %v1283, %v1315
          %v1323 = vadd.f32 %v1284, %v1315
          %v1324 = vadd.f32 %v1285, %v1315
          %v1325 = vadd.f32 %v1286, %v1315
          %v1326 = vadd.f32 %v1287, %v1315
          %v1327 = vadd.f32 %v1288, %v1315
          %v1328 = vadd.f32 %v1289, %v1315
          %v1329 = vadd.f32 %v1290, %v1315
          %v1330 = vadd.f32 %v1291, %v1315
          %v1331 = vadd.f32 %v1292, %v1315
          %v1332 = vadd.f32 %v1293, %v1315
          %v1333 = vadd.f32 %v1294, %v1315
          %v1334 = vadd.f32 %v1295, %v1315
          %v1335 = vadd.f32 %v1296, %v1315
          %v1336 = vadd.f32 %v1297, %v1315
          %v1337 = vadd.f32 %v1298, %v1315
          %v1338 = vadd.f32 %v1299, %v1315
          %v1339 = vadd.f32 %v1300, %v1315
          %v1340 = vadd.f32 %v1301, %v1315
          %v1341 = vadd.f32 %v1302, %v1315
          %v1342 = vadd.f32 %v1303, %v1315
          %v1343 = vadd.f32 %v1304, %v1315
          %v1344 = vadd.f32 %v1305, %v1315
          %v1345 = vadd.f32 %v1306, %v1315
          %v1346 = vadd.f32 %v1307, %v1315
          %v1347 = vadd.f32 %v1308, %v1315
          %v1348 = vadd.f32 %v1309, %v1315
          %p1349 = scmp.lt.s32.totalorder %s27, 2
          %v1350 = vmax.f32 %v1317, 0.0
          %v1351 = vmax.f32 %v1318, 0.0
          %v1352 = vmax.f32 %v1319, 0.0
          %v1353 = vmax.f32 %v1320, 0.0
          %v1354 = vmax.f32 %v1321, 0.0
          %v1355 = vmax.f32 %v1322, 0.0
          %v1356 = vmax.f32 %v1323, 0.0
          %v1357 = vmax.f32 %v1324, 0.0
          %v1358 = vmax.f32 %v1325, 0.0
          %v1359 = vmax.f32 %v1326, 0.0
          %v1360 = vmax.f32 %v1327, 0.0
          %v1361 = vmax.f32 %v1328, 0.0
          %v1362 = vmax.f32 %v1329, 0.0
          %v1363 = vmax.f32 %v1330, 0.0
          %v1364 = vmax.f32 %v1331, 0.0
          %v1365 = vmax.f32 %v1332, 0.0
          %v1366 = vmax.f32 %v1333, 0.0
          %v1367 = vmax.f32 %v1334, 0.0
          %v1368 = vmax.f32 %v1335, 0.0
          %v1369 = vmax.f32 %v1336, 0.0
          %v1370 = vmax.f32 %v1337, 0.0
          %v1371 = vmax.f32 %v1338, 0.0
          %v1372 = vmax.f32 %v1339, 0.0
          %v1373 = vmax.f32 %v1340, 0.0
          %v1374 = vmax.f32 %v1341, 0.0
          %v1375 = vmax.f32 %v1342, 0.0
          %v1376 = vmax.f32 %v1343, 0.0
          %v1377 = vmax.f32 %v1344, 0.0
          %v1378 = vmax.f32 %v1345, 0.0
          %v1379 = vmax.f32 %v1346, 0.0
          %v1380 = vmax.f32 %v1347, 0.0
          %v1381 = vmax.f32 %v1348, 0.0
          %s1382 = scalar_select %p1349, 1, 0
          %v1383 = vstv %s1382
          %vm1384 = vcmp.eq.s32.totalorder %v1383, 1
          %v1385 = vsel %vm1384, %v1350, %v1317
          %v1386 = vsel %vm1384, %v1351, %v1318
          %v1387 = vsel %vm1384, %v1352, %v1319
          %v1388 = vsel %vm1384, %v1353, %v1320
          %v1389 = vsel %vm1384, %v1354, %v1321
          %v1390 = vsel %vm1384, %v1355, %v1322
          %v1391 = vsel %vm1384, %v1356, %v1323
          %v1392 = vsel %vm1384, %v1357, %v1324
          %v1393 = vsel %vm1384, %v1358, %v1325
          %v1394 = vsel %vm1384, %v1359, %v1326
          %v1395 = vsel %vm1384, %v1360, %v1327
          %v1396 = vsel %vm1384, %v1361, %v1328
          %v1397 = vsel %vm1384, %v1362, %v1329
          %v1398 = vsel %vm1384, %v1363, %v1330
          %v1399 = vsel %vm1384, %v1364, %v1331
          %v1400 = vsel %vm1384, %v1365, %v1332
          %v1401 = vsel %vm1384, %v1366, %v1333
          %v1402 = vsel %vm1384, %v1367, %v1334
          %v1403 = vsel %vm1384, %v1368, %v1335
          %v1404 = vsel %vm1384, %v1369, %v1336
          %v1405 = vsel %vm1384, %v1370, %v1337
          %v1406 = vsel %vm1384, %v1371, %v1338
          %v1407 = vsel %vm1384, %v1372, %v1339
          %v1408 = vsel %vm1384, %v1373, %v1340
          %v1409 = vsel %vm1384, %v1374, %v1341
          %v1410 = vsel %vm1384, %v1375, %v1342
          %v1411 = vsel %vm1384, %v1376, %v1343
          %v1412 = vsel %vm1384, %v1377, %v1344
          %v1413 = vsel %vm1384, %v1378, %v1345
          %v1414 = vsel %vm1384, %v1379, %v1346
          %v1415 = vsel %vm1384, %v1380, %v1347
          %v1416 = vsel %vm1384, %v1381, %v1348
          %s1417 = smul.u32 %s28, 256
          %s1418 = scalar_lea.vmem [#allocation2], %s1417
          %1419 = vst [vmem:[%s1418] sm:$0xff] %v1385
          %1420 = vst [vmem:[%s1418 + $0x8] sm:$0xff] %v1386
          %1421 = vst [vmem:[%s1418 + $0x10] sm:$0xff] %v1387
          %1422 = vst [vmem:[%s1418 + $0x18] sm:$0xff] %v1388
          %1423 = vst [vmem:[%s1418 + $0x20] sm:$0xff] %v1389
          %1424 = vst [vmem:[%s1418 + $0x28] sm:$0xff] %v1390
          %1425 = vst [vmem:[%s1418 + $0x30] sm:$0xff] %v1391
          %1426 = vst [vmem:[%s1418 + $0x38] sm:$0xff] %v1392
          %1427 = vst [vmem:[%s1418 + $0x40] sm:$0xff] %v1393
          %1428 = vst [vmem:[%s1418 + $0x48] sm:$0xff] %v1394
          %1429 = vst [vmem:[%s1418 + $0x50] sm:$0xff] %v1395
          %1430 = vst [vmem:[%s1418 + $0x58] sm:$0xff] %v1396
          %1431 = vst [vmem:[%s1418 + $0x60] sm:$0xff] %v1397
          %1432 = vst [vmem:[%s1418 + $0x68] sm:$0xff] %v1398
          %1433 = vst [vmem:[%s1418 + $0x70] sm:$0xff] %v1399
          %1434 = vst [vmem:[%s1418 + $0x78] sm:$0xff] %v1400
          %1435 = vst [vmem:[%s1418 + $0x80] sm:$0xff] %v1401
          %1436 = vst [vmem:[%s1418 + $0x88] sm:$0xff] %v1402
          %1437 = vst [vmem:[%s1418 + $0x90] sm:$0xff] %v1403
          %1438 = vst [vmem:[%s1418 + $0x98] sm:$0xff] %v1404
          %1439 = vst [vmem:[%s1418 + $0xa0] sm:$0xff] %v1405
          %1440 = vst [vmem:[%s1418 + $0xa8] sm:$0xff] %v1406
          %1441 = vst [vmem:[%s1418 + $0xb0] sm:$0xff] %v1407
          %1442 = vst [vmem:[%s1418 + $0xb8] sm:$0xff] %v1408
          %1443 = vst [vmem:[%s1418 + $0xc0] sm:$0xff] %v1409
          %1444 = vst [vmem:[%s1418 + $0xc8] sm:$0xff] %v1410
          %1445 = vst [vmem:[%s1418 + $0xd0] sm:$0xff] %v1411
          %1446 = vst [vmem:[%s1418 + $0xd8] sm:$0xff] %v1412
          %1447 = vst [vmem:[%s1418 + $0xe0] sm:$0xff] %v1413
          %1448 = vst [vmem:[%s1418 + $0xe8] sm:$0xff] %v1414
          %1449 = vst [vmem:[%s1418 + $0xf0] sm:$0xff] %v1415
          %1450 = vst [vmem:[%s1418 + $0xf8] sm:$0xff] %v1416
        $region84: #{tpu_custom_call.1} parent=47 // pred_fallthru
          _
        %p1451 = scmp.eq.s32.totalorder %s27, 2
        %p1452 = pnand %p1451, %p389
        %p1453 = pneg %p1452
        %p1454 = pnand %p1453, %p392
        %p1455 = pneg %p1454
        // Predicated region
        $region85: #{tpu_custom_call.1} parent=47 // pred_check
          _
        $region86: #{tpu_custom_call.1} parent=47 // pred_check_branch
          %1457 = sbr.rel (%p1454) target = $region88
        $region87: #{tpu_custom_call.1} parent=47 // pred_region
          %v1458 = vld [vmem:[#allocation11] sm:$0xff]
          %v1459 = vld [vmem:[#allocation11 + $0x8] sm:$0xff]
          %v1460 = vld [vmem:[#allocation2] sm:$0xff]
          %v1461 = vld [vmem:[#allocation2 + $0x8] sm:$0xff]
          %v1462 = vld [vmem:[#allocation2 + $0x10] sm:$0xff]
          %v1463 = vld [vmem:[#allocation2 + $0x18] sm:$0xff]
          %v1464 = vld [vmem:[#allocation2 + $0x20] sm:$0xff]
          %v1465 = vld [vmem:[#allocation2 + $0x28] sm:$0xff]
          %v1466 = vld [vmem:[#allocation2 + $0x30] sm:$0xff]
          %v1467 = vld [vmem:[#allocation2 + $0x38] sm:$0xff]
          %v1468 = vld [vmem:[#allocation2 + $0x40] sm:$0xff]
          %v1469 = vld [vmem:[#allocation2 + $0x48] sm:$0xff]
          %v1470 = vld [vmem:[#allocation2 + $0x50] sm:$0xff]
          %v1471 = vld [vmem:[#allocation2 + $0x58] sm:$0xff]
          %v1472 = vld [vmem:[#allocation2 + $0x60] sm:$0xff]
          %v1473 = vld [vmem:[#allocation2 + $0x68] sm:$0xff]
          %v1474 = vld [vmem:[#allocation2 + $0x70] sm:$0xff]
          %v1475 = vld [vmem:[#allocation2 + $0x78] sm:$0xff]
          %v1476 = vld [vmem:[#allocation2 + $0x80] sm:$0xff]
          %v1477 = vld [vmem:[#allocation2 + $0x88] sm:$0xff]
          %v1478 = vld [vmem:[#allocation2 + $0x90] sm:$0xff]
          %v1479 = vld [vmem:[#allocation2 + $0x98] sm:$0xff]
          %v1480 = vld [vmem:[#allocation2 + $0xa0] sm:$0xff]
          %v1481 = vld [vmem:[#allocation2 + $0xa8] sm:$0xff]
          %v1482 = vld [vmem:[#allocation2 + $0xb0] sm:$0xff]
          %v1483 = vld [vmem:[#allocation2 + $0xb8] sm:$0xff]
          %v1484 = vld [vmem:[#allocation2 + $0xc0] sm:$0xff]
          %v1485 = vld [vmem:[#allocation2 + $0xc8] sm:$0xff]
          %v1486 = vld [vmem:[#allocation2 + $0xd0] sm:$0xff]
          %v1487 = vld [vmem:[#allocation2 + $0xd8] sm:$0xff]
          %v1488 = vld [vmem:[#allocation2 + $0xe0] sm:$0xff]
          %v1489 = vld [vmem:[#allocation2 + $0xe8] sm:$0xff]
          %v1490 = vld [vmem:[#allocation2 + $0xf0] sm:$0xff]
          %v1491 = vld [vmem:[#allocation2 + $0xf8] sm:$0xff]
          %1492 = vmatprep.subr.mxu0 0.0
          %1493 = vmatpush1.msra.mxu0 %v1460
          %1494 = vmatprep.subr.mxu0 0.0
          %1495 = vmatpush1.msra.mxu0 %v1461
          %1496 = vmatprep.subr.mxu0 0.0
          %1497 = vmatpush1.msra.mxu0 %v1462
          %1498 = vmatprep.subr.mxu0 0.0
          %1499 = vmatpush1.msra.mxu0 %v1463
          %1500 = vmatprep.subr.mxu0 0.0
          %1501 = vmatpush1.msra.mxu0 %v1464
          %1502 = vmatprep.subr.mxu0 0.0
          %1503 = vmatpush1.msra.mxu0 %v1465
          %1504 = vmatprep.subr.mxu0 0.0
          %1505 = vmatpush1.msra.mxu0 %v1466
          %1506 = vmatprep.subr.mxu0 0.0
          %1507 = vmatpush1.msra.mxu0 %v1467
          %1508 = vmatprep.subr.mxu0 0.0
          %1509 = vmatpush1.msra.mxu0 %v1468
          %1510 = vmatprep.subr.mxu0 0.0
          %1511 = vmatpush1.msra.mxu0 %v1469
          %1512 = vmatprep.subr.mxu0 0.0
          %1513 = vmatpush1.msra.mxu0 %v1470
          %1514 = vmatprep.subr.mxu0 0.0
          %1515 = vmatpush1.msra.mxu0 %v1471
          %1516 = vmatprep.subr.mxu0 0.0
          %1517 = vmatpush1.msra.mxu0 %v1472
          %1518 = vmatprep.subr.mxu0 0.0
          %1519 = vmatpush1.msra.mxu0 %v1473
          %1520 = vmatprep.subr.mxu0 0.0
          %1521 = vmatpush1.msra.mxu0 %v1474
          %1522 = vmatprep.subr.mxu0 0.0
          %1523 = vmatpush1.msra.mxu0 %v1475
          %1524 = vmatprep.subr.mxu0 0.0
          %1525 = vmatpush1.msra.mxu0 %v1476
          %1526 = vmatprep.subr.mxu0 0.0
          %1527 = vmatpush1.msra.mxu0 %v1477
          %1528 = vmatprep.subr.mxu0 0.0
          %1529 = vmatpush1.msra.mxu0 %v1478
          %1530 = vmatprep.subr.mxu0 0.0
          %1531 = vmatpush1.msra.mxu0 %v1479
          %1532 = vmatprep.subr.mxu0 0.0
          %1533 = vmatpush1.msra.mxu0 %v1480
          %1534 = vmatprep.subr.mxu0 0.0
          %1535 = vmatpush1.msra.mxu0 %v1481
          %1536 = vmatprep.subr.mxu0 0.0
          %1537 = vmatpush1.msra.mxu0 %v1482
          %1538 = vmatprep.subr.mxu0 0.0
          %1539 = vmatpush1.msra.mxu0 %v1483
          %1540 = vmatprep.subr.mxu0 0.0
          %1541 = vmatpush1.msra.mxu0 %v1484
          %1542 = vmatprep.subr.mxu0 0.0
          %1543 = vmatpush1.msra.mxu0 %v1485
          %1544 = vmatprep.subr.mxu0 0.0
          %1545 = vmatpush1.msra.mxu0 %v1486
          %1546 = vmatprep.subr.mxu0 0.0
          %1547 = vmatpush1.msra.mxu0 %v1487
          %1548 = vmatprep.subr.mxu0 0.0
          %1549 = vmatpush1.msra.mxu0 %v1488
          %1550 = vmatprep.subr.mxu0 0.0
          %1551 = vmatpush1.msra.mxu0 %v1489
          %1552 = vmatprep.subr.mxu0 0.0
          %1553 = vmatpush1.msra.mxu0 %v1490
          %1554 = vmatprep.subr.mxu0 0.0
          %1555 = vmatpush1.msra.mxu0 %v1491
          %1556 = vmatprep.mubr.f32.mxu0 %v1459
          %1557 = vmatmul.mubr.f32.gmra.mrb[0].mxu0 %v1458
          %v1558 = vpop.f32.mrb[0].mxu0
          %v1559 = vadd.f32 0.0, %v1558
          %v1560 = vpop.f32.mrb[0].mxu0
          %1561 = vdwg.mxu0
          %v1562 = vld [vmem:[#allocation12] sm:$0xff]
          %v1563 = vld [vmem:[#allocation12 + $0x8] sm:$0xff]
          %v1564 = vld [vmem:[#allocation12 + $0x10] sm:$0xff]
          %v1565 = vld [vmem:[#allocation12 + $0x18] sm:$0xff]
          %v1566 = vld [vmem:[#allocation12 + $0x20] sm:$0xff]
          %v1567 = vld [vmem:[#allocation12 + $0x28] sm:$0xff]
          %v1568 = vld [vmem:[#allocation12 + $0x30] sm:$0xff]
          %v1569 = vld [vmem:[#allocation12 + $0x38] sm:$0xff]
          %v1570 = vld [vmem:[#allocation12 + $0x40] sm:$0xff]
          %v1571 = vld [vmem:[#allocation12 + $0x48] sm:$0xff]
          %v1572 = vld [vmem:[#allocation12 + $0x50] sm:$0xff]
          %v1573 = vld [vmem:[#allocation12 + $0x58] sm:$0xff]
          %v1574 = vld [vmem:[#allocation12 + $0x60] sm:$0xff]
          %v1575 = vld [vmem:[#allocation12 + $0x68] sm:$0xff]
          %v1576 = vld [vmem:[#allocation12 + $0x70] sm:$0xff]
          %v1577 = vld [vmem:[#allocation12 + $0x78] sm:$0xff]
          %v1578 = vld [vmem:[%s6] sm:$0x1]
          %v1580 = vlaneseq
          %v1581 = vshrl.u32 %v1580, 7
          %v1582 = vsub.s32 0, %v1581
          %v1583 = vrot.slane %v1578, %v1582
          %1585 = vmatprep.subr.mxu0 0.0
          %1586 = vmatpush1.msra.mxu0 %v1562
          %1587 = vmatprep.subr.mxu0 0.0
          %1588 = vmatpush1.msra.mxu0 %v1563
          %1589 = vmatprep.subr.mxu0 0.0
          %1590 = vmatpush1.msra.mxu0 %v1564
          %1591 = vmatprep.subr.mxu0 0.0
          %1592 = vmatpush1.msra.mxu0 %v1565
          %1593 = vmatprep.subr.mxu0 0.0
          %1594 = vmatpush1.msra.mxu0 %v1566
          %1595 = vmatprep.subr.mxu0 0.0
          %1596 = vmatpush1.msra.mxu0 %v1567
          %1597 = vmatprep.subr.mxu0 0.0
          %1598 = vmatpush1.msra.mxu0 %v1568
          %1599 = vmatprep.subr.mxu0 0.0
          %1600 = vmatpush1.msra.mxu0 %v1569
          %1601 = vmatprep.subr.mxu0 0.0
          %1602 = vmatpush1.msra.mxu0 %v1570
          %1603 = vmatprep.subr.mxu0 0.0
          %1604 = vmatpush1.msra.mxu0 %v1571
          %1605 = vmatprep.subr.mxu0 0.0
          %1606 = vmatpush1.msra.mxu0 %v1572
          %1607 = vmatprep.subr.mxu0 0.0
          %1608 = vmatpush1.msra.mxu0 %v1573
          %1609 = vmatprep.subr.mxu0 0.0
          %1610 = vmatpush1.msra.mxu0 %v1574
          %1611 = vmatprep.subr.mxu0 0.0
          %1612 = vmatpush1.msra.mxu0 %v1575
          %1613 = vmatprep.subr.mxu0 0.0
          %1614 = vmatpush1.msra.mxu0 %v1576
          %1615 = vmatprep.subr.mxu0 0.0
          %1616 = vmatpush1.msra.mxu0 %v1577
          %1617 = vmatprep.subr.mxu0 0.0
          %1618 = vmatpush1.msra.mxu0 0.0
          %1619 = vmatprep.subr.mxu0 0.0
          %1620 = vmatpush1.msra.mxu0 0.0
          %1621 = vmatprep.subr.mxu0 0.0
          %1622 = vmatpush1.msra.mxu0 0.0
          %1623 = vmatprep.subr.mxu0 0.0
          %1624 = vmatpush1.msra.mxu0 0.0
          %1625 = vmatprep.subr.mxu0 0.0
          %1626 = vmatpush1.msra.mxu0 0.0
          %1627 = vmatprep.subr.mxu0 0.0
          %1628 = vmatpush1.msra.mxu0 0.0
          %1629 = vmatprep.subr.mxu0 0.0
          %1630 = vmatpush1.msra.mxu0 0.0
          %1631 = vmatprep.subr.mxu0 0.0
          %1632 = vmatpush1.msra.mxu0 0.0
          %1633 = vmatprep.subr.mxu0 0.0
          %1634 = vmatpush1.msra.mxu0 0.0
          %1635 = vmatprep.subr.mxu0 0.0
          %1636 = vmatpush1.msra.mxu0 0.0
          %1637 = vmatprep.subr.mxu0 0.0
          %1638 = vmatpush1.msra.mxu0 0.0
          %1639 = vmatprep.subr.mxu0 0.0
          %1640 = vmatpush1.msra.mxu0 0.0
          %1641 = vmatprep.subr.mxu0 0.0
          %1642 = vmatpush1.msra.mxu0 0.0
          %1643 = vmatprep.subr.mxu0 0.0
          %1644 = vmatpush1.msra.mxu0 0.0
          %1645 = vmatprep.subr.mxu0 0.0
          %1646 = vmatpush1.msra.mxu0 0.0
          %1647 = vmatprep.subr.mxu0 0.0
          %1648 = vmatpush1.msra.mxu0 0.0
          %1649 = vmatprep.mubr.f32.mxu0 0.0
          %1650 = vmatmul.mubr.f32.gmra.mrb[0].mxu0 %v1559
          %v1651 = vpop.f32.mrb[0].mxu0
          %v1652 = vadd.f32 %v1583, %v1651
          %v1653 = vpop.f32.mrb[0].mxu0
          %1654 = vdwg.mxu0
          %1655 = vst [vmem:[#allocation14] sm:$0xff] %v1652
        $region88: #{tpu_custom_call.1} parent=47 // pred_fallthru
          _
        // Predicated region
        $region89: #{tpu_custom_call.1} parent=47 // pred_check
          %p1656 = pneg %p218
        $region90: #{tpu_custom_call.1} parent=47 // pred_check_branch
          %1658 = sbr.rel (%p1656) target = $region92
        $region91: #{tpu_custom_call.1} parent=47 // pred_region
          %s1660 = ssub.s32 128, 128
          %1661 = vsyncadd [#allocation7], %s1660
          %s1663 = sshll.u32 [#allocation14], 4
          %s1664 = int_to_ptr.vmem [resolvable:$true] %s1663
          %1666 = dma.vmem_to_hbm [thread:$0]  %s1664, 128, %s7, [#allocation7]
        $region92: #{tpu_custom_call.1} parent=47 // pred_fallthru
          _
        // Predicated region
        $region93: #{tpu_custom_call.1} parent=47 // pred_check
          %p1667 = pneg %p218
        $region94: #{tpu_custom_call.1} parent=47 // pred_check_branch
          %1669 = sbr.rel (%p1667) target = $region96
        $region95: #{tpu_custom_call.1} parent=47 // pred_region
          %1670 = dma.done [#allocation7], 128
        $region96: #{tpu_custom_call.1} parent=47 // pred_fallthru
          _
      $region48: #{tpu_custom_call.1} parent=5 // pred_fallthru
        _
      %p1671 = scmp.le.s32.totalorder 2, %s17
      // Predicated region
      $region97: #{tpu_custom_call.1} parent=5 // pred_check
        %p1672 = pneg %p1671
      $region98: #{tpu_custom_call.1} parent=5 // pred_check_branch
        %1674 = sbr.rel (%p1672) target = $region100
      $region99: #{tpu_custom_call.1} parent=5 // pred_region
        %s1675 = ssub.s32 %s17, 2
      $region100: #{tpu_custom_call.1} parent=5 // pred_fallthru
        _
    $region6: #{tpu_custom_call.1} parent=1 // loop_footer
      %s21 = sadd.s32 1, %s17
    $region7: #{tpu_custom_call.1} parent=1 // loop_footer_branch
      %16 = sbr.rel target = $region3
    $region8: #{tpu_custom_call.1} parent=1 // loop_exit
      _
    %1676 = vsyncpa [#allocation6], 1
    %s1677 = scalar_lea.sflag [#allocation6], 1
    %1678 = vsyncpa %s1677, 1
    %1679 = vsyncpa [#allocation9], 1
    %1680 = vsyncpa [#allocation13], 1
    %1681 = vsyncpa [#allocation7], 1
    %s1682 = scalar_lea.sflag [#allocation7], 1
    %1683 = vsyncpa %s1682, 1

</llo_original>
